<compile_context>
chip_gen: v5e
topology: v5e:2x2
jax: 0.10.0
libtpu: 0.0.40
codegen_flags: <defaults>
</compile_context>

<pallas_src>
import functools
from typing import NamedTuple

import jax
import jax.numpy as jnp
from jax.experimental import pallas as pl
from jax.experimental.pallas import tpu as pltpu

LANE = 128


def _round_up(x, m):
    return (x + m - 1) // m * m


def _vmem_capacity_bytes():
    try:
        return int(pltpu.get_tpu_info().vmem_capacity_bytes)
    except Exception:
        # Unknown platform (e.g. interpret mode): assume the smallest part (v7x per-TC).
        return 64 * 1024 * 1024


def _const_block_spec(shape):
    """Grid-invariant block (constant index_map) -> stays resident in VMEM.

    Single-buffer it (pl.Buffered(1)) since it never changes across grid steps; fall
    back silently if this JAX version's BlockSpec has no pipeline_mode kwarg.
    """
    index_map = lambda i: (0,) * len(shape)
    if hasattr(pl, "Buffered"):
        try:
            return pl.BlockSpec(shape, index_map, pipeline_mode=pl.Buffered(1))
        except TypeError:
            pass
    return pl.BlockSpec(shape, index_map)


class PaddedMLPParams(NamedTuple):
    tensors: tuple        # (w1, b1, ..., w5, b5), padded + cast
    input_dim: int
    hidden_dim: int
    output_dim: int
    in_p: int
    hid_p: int
    out_p: int
    compute_dtype: object


def pad_mlp_params(params, compute_dtype=jnp.bfloat16):
    """Pad + cast weights ONCE (at init / param-update time, not per forward call)."""
    w1 = params[0]
    w5 = params[8]
    input_dim, hidden_dim = int(w1.shape[0]), int(w1.shape[1])
    output_dim = int(w5.shape[1])

    in_p = _round_up(input_dim, LANE)
    hid_p = _round_up(hidden_dim, LANE)
    out_p = _round_up(output_dim, LANE)

    layer_dims = [(in_p, hid_p), (hid_p, hid_p), (hid_p, hid_p),
                  (hid_p, hid_p), (hid_p, out_p)]
    tensors = []
    for (w, b), (di, do) in zip(zip(params[0::2], params[1::2]), layer_dims):
        wp = jnp.zeros((di, do), compute_dtype).at[:w.shape[0], :w.shape[1]].set(
            w.astype(compute_dtype))
        bp = jnp.zeros((1, do), jnp.float32).at[:, :b.shape[1]].set(
            b.astype(jnp.float32))
        tensors += [wp, bp]

    return PaddedMLPParams(tuple(tensors), input_dim, hidden_dim, output_dim,
                           in_p, hid_p, out_p, compute_dtype)


def mlp_kernel(x_ref,
               w1_ref, b1_ref,
               w2_ref, b2_ref,
               w3_ref, b3_ref,
               w4_ref, b4_ref,
               w5_ref, b5_ref,
               o_ref, *, valid_out):
    """One batch tile: 5 matmuls, 4 ReLUs, (masked) log_softmax over the feature axis."""
    compute_dtype = w1_ref.dtype            # bf16 fast path, f32 check path
    x = x_ref[...].astype(compute_dtype)

    def linear_relu(h, w_ref, b_ref):
        # MXU matmul with f32 accumulation; bias/ReLU in f32 (v5e-safe), cast back down
        # only for the next MXU pass.
        y = jnp.dot(h, w_ref[...], preferred_element_type=jnp.float32)
        y = y + b_ref[...].astype(jnp.float32)
        return jnp.maximum(y, 0.0).astype(compute_dtype)

    h = linear_relu(x, w1_ref, b1_ref)
    h = linear_relu(h, w2_ref, b2_ref)
    h = linear_relu(h, w3_ref, b3_ref)
    h = linear_relu(h, w4_ref, b4_ref)

    # Final layer (no ReLU), f32 logits.
    logits = jnp.dot(h, w5_ref[...], preferred_element_type=jnp.float32)
    logits = logits + b5_ref[...].astype(jnp.float32)

    # Mask padded output columns only when padding exists (static check -> free).
    if logits.shape[-1] != valid_out:
        col = jax.lax.broadcasted_iota(jnp.int32, logits.shape, dimension=1)
        logits = jnp.where(col < valid_out, logits, jnp.float32(-1e30))

    m = jnp.max(logits, axis=-1, keepdims=True)
    shifted = logits - m
    # exp(-1e30 - m) underflows to exactly 0, so no extra select is needed for the
    # padded columns; only the -1e30 fill before the max matters.
    lse = jnp.log(jnp.sum(jnp.exp(shifted), axis=-1, keepdims=True))
    o_ref[...] = (shifted - lse).astype(o_ref.dtype)


def mlp_forward(x, padded: PaddedMLPParams, *, block_m=None, out_dtype=jnp.float32):
    """Forward pass. `padded` comes from pad_mlp_params (weights already padded/cast)."""
    n, input_dim = x.shape
    assert input_dim == padded.input_dim, "input feature dim mismatch"
    compute_dtype = padded.compute_dtype
    in_p, hid_p, out_p = padded.in_p, padded.hid_p, padded.out_p

    itemsize = jnp.dtype(compute_dtype).itemsize
    out_itemsize = jnp.dtype(out_dtype).itemsize
    row_align = 16 if itemsize == 2 else 8          # bf16 packs 16 rows per vreg
    weight_bytes = sum(int(t.size) * t.dtype.itemsize for t in padded.tensors)
    vmem_cap = _vmem_capacity_bytes()

    if block_m is None:
        # Big tiles amortize the ~0.35us/grid-step overhead. Cap is derived from VMEM:
        # 2048 rows on the 128 MiB parts (v5e/v6e), 512 on v7x (64 MiB), further bounded
        # by what actually fits alongside the resident weights.
        hard_cap = 2048 if vmem_cap >= 100 * 1024 * 1024 else 512
        per_row_bytes = 2 * (in_p * itemsize + out_p * out_itemsize)
        budget = vmem_cap // 2 - 2 * weight_bytes - (4 << 20)
        fit_cap = max(row_align, (max(budget, 0) // per_row_bytes)
                      // row_align * row_align)
        # Keep >= 2 grid steps so both v7x TensorCores get work ("parallel" axis) and
        # the input/output pipeline overlaps DMA with compute.
        half = _round_up(pl.cdiv(n, 2), row_align)
        block_m = max(row_align, min(hard_cap, fit_cap, half))
    block_m = max(row_align, _round_up(block_m, row_align))
    n_p = _round_up(n, block_m)

    # Pad/cast activations only when actually needed (weights were padded at init).
    if (n_p, in_p) != (n, input_dim) or x.dtype != compute_dtype:
        x_p = jnp.zeros((n_p, in_p), compute_dtype).at[:n, :input_dim].set(
            x.astype(compute_dtype))
    else:
        x_p = x

    in_specs = [pl.BlockSpec((block_m, in_p), lambda i: (i, 0))]
    for t in padded.tensors:
        in_specs.append(_const_block_spec(t.shape))
    out_spec = pl.BlockSpec((block_m, out_p), lambda i: (i, 0))

    # Explicit VMEM budget: double-buffered x/out tiles + weights (counted twice as a
    # safety margin in case Buffered(1) is not honored) + headroom for compiler scratch.
    vmem_needed = (2 * block_m * in_p * itemsize
                   + 2 * block_m * out_p * out_itemsize
                   + 2 * weight_bytes
                   + (2 << 20))
    if vmem_needed > vmem_cap:
        raise ValueError(
            f"MLP tile config needs ~{vmem_needed} B of VMEM but only {vmem_cap} B is "
            f"available on this part; reduce block_m or hidden_dim.")
    vmem_limit = min(_round_up(vmem_needed, 1 << 20), vmem_cap)

    flops = 2 * n_p * (in_p * hid_p + 3 * hid_p * hid_p + hid_p * out_p)
    bytes_accessed = (int(x_p.size) * itemsize + weight_bytes
                      + n_p * out_p * out_itemsize)
    cost = pl.CostEstimate(flops=flops, transcendentals=n_p * out_p,
                           bytes_accessed=bytes_accessed)

    kernel = functools.partial(mlp_kernel, valid_out=padded.output_dim)

    out_padded = pl.pallas_call(
        kernel,
        out_shape=jax.ShapeDtypeStruct((n_p, out_p), out_dtype),
        grid_spec=pltpu.PrefetchScalarGridSpec(
            num_scalar_prefetch=0,
            grid=(n_p // block_m,),
            in_specs=in_specs,
            out_specs=out_spec,
        ),
        compiler_params=pltpu.CompilerParams(
            dimension_semantics=("parallel",),
            vmem_limit_bytes=int(vmem_limit),
        ),
        cost_estimate=cost,
    )(x_p, *padded.tensors)

    # TODO(synk): let callers that tolerate it consume the padded (n_p, out_p) block (or
    # bf16 output) directly; this slice materializes an extra XLA copy.
    return out_padded[:n, :padded.output_dim]


def init_mlp_params(key, input_dim, hidden_dim, output_dim):
    """Deterministic init matching nn.Linear shapes (weights stored (in, out))."""
    dims = [(input_dim, hidden_dim),
            (hidden_dim, hidden_dim),
            (hidden_dim, hidden_dim),
            (hidden_dim, hidden_dim),
            (hidden_dim, output_dim)]
    params = []
    for i, (fan_in, fan_out) in enumerate(dims):
        kw, kb = jax.random.split(jax.random.fold_in(key, i))
        bound = 1.0 / jnp.sqrt(fan_in)
        w = jax.random.uniform(kw, (fan_in, fan_out), jnp.float32, -bound, bound)
        b = jax.random.uniform(kb, (1, fan_out), jnp.float32, -bound, bound)
        params += [w, b]
    return tuple(params)


def mlp_reference(x, params):
    """Pure-JAX f32 reference for the correctness check."""
    h = x
    for w, b in zip(params[0:8:2], params[1:8:2]):
        h = jnp.maximum(h @ w + b, 0.0)
    logits = h @ params[8] + params[9]
    return jax.nn.log_softmax(logits, axis=1)


if __name__ == "__main__":
    key = jax.random.PRNGKey(0)

    # Small shapes consistent with the module; batch deliberately NOT a multiple of the
    # tile so padding is exercised, and large enough for a >=2-step grid.
    batch = 250
    input_dim = 16
    hidden_dim = 32
    output_dim = 10

    kx, kp = jax.random.split(key)
    x = jax.random.normal(kx, (batch, input_dim), jnp.float32)
    params = init_mlp_params(kp, input_dim, hidden_dim, output_dim)

    ref = mlp_reference(x, params)

    # f32 path with an explicit tile: tight numerical/structural check.
    padded_f32 = pad_mlp_params(params, compute_dtype=jnp.float32)
    out_f32 = jax.block_until_ready(mlp_forward(x, padded_f32, block_m=128))
    assert out_f32.shape == (batch, output_dim)
    assert jnp.allclose(out_f32, ref, atol=1e-5, rtol=1e-5), "f32 mismatch vs reference"

    # bf16 fast path with the default (VMEM/megacore-aware) block_m heuristic.
    padded_bf16 = pad_mlp_params(params, compute_dtype=jnp.bfloat16)
    out_bf16 = jax.block_until_ready(mlp_forward(x, padded_bf16))
    assert out_bf16.shape == (batch, output_dim)
    assert jnp.allclose(out_bf16, ref, atol=5e-2, rtol=5e-2), "bf16 mismatch vs reference"

    print("KERNEL_OK")
</pallas_src>

<mosaic_0001>
module attributes {stable_mosaic.version = 11 : i64} {
  func.func @mlp_kernel(%arg0: i32, %arg1: memref<128x128xf32, #tpu.memory_space<vmem>>, %arg2: memref<128x128xf32, #tpu.memory_space<vmem>>, %arg3: memref<1x128xf32, #tpu.memory_space<vmem>>, %arg4: memref<128x128xf32, #tpu.memory_space<vmem>>, %arg5: memref<1x128xf32, #tpu.memory_space<vmem>>, %arg6: memref<128x128xf32, #tpu.memory_space<vmem>>, %arg7: memref<1x128xf32, #tpu.memory_space<vmem>>, %arg8: memref<128x128xf32, #tpu.memory_space<vmem>>, %arg9: memref<1x128xf32, #tpu.memory_space<vmem>>, %arg10: memref<128x128xf32, #tpu.memory_space<vmem>>, %arg11: memref<1x128xf32, #tpu.memory_space<vmem>>, %arg12: memref<128x128xf32, #tpu.memory_space<vmem>>) attributes {dimension_semantics = [#tpu.dimension_semantics<parallel>], iteration_bounds = array<i64: 2>, scalar_prefetch = 0 : i64, scratch_operands = 0 : i64, tpu.core_type = #tpu.core_type<tc>, window_params = [{transform_indices = @transform_0, window_bounds = array<i64: 128, 128>}, {pipeline_mode = #tpu.pipeline_mode<synchronous>, transform_indices = @transform_1, window_bounds = array<i64: 128, 128>}, {pipeline_mode = #tpu.pipeline_mode<synchronous>, transform_indices = @transform_2, window_bounds = array<i64: 1, 128>}, {pipeline_mode = #tpu.pipeline_mode<synchronous>, transform_indices = @transform_3, window_bounds = array<i64: 128, 128>}, {pipeline_mode = #tpu.pipeline_mode<synchronous>, transform_indices = @transform_4, window_bounds = array<i64: 1, 128>}, {pipeline_mode = #tpu.pipeline_mode<synchronous>, transform_indices = @transform_5, window_bounds = array<i64: 128, 128>}, {pipeline_mode = #tpu.pipeline_mode<synchronous>, transform_indices = @transform_6, window_bounds = array<i64: 1, 128>}, {pipeline_mode = #tpu.pipeline_mode<synchronous>, transform_indices = @transform_7, window_bounds = array<i64: 128, 128>}, {pipeline_mode = #tpu.pipeline_mode<synchronous>, transform_indices = @transform_8, window_bounds = array<i64: 1, 128>}, {pipeline_mode = #tpu.pipeline_mode<synchronous>, transform_indices = @transform_9, window_bounds = array<i64: 128, 128>}, {pipeline_mode = #tpu.pipeline_mode<synchronous>, transform_indices = @transform_10, window_bounds = array<i64: 1, 128>}, {transform_indices = @transform_11, window_bounds = array<i64: 128, 128>}]} {
    %c0 = arith.constant 0 : index
    %c0_0 = arith.constant 0 : index
    %0 = vector.load %arg1[%c0, %c0_0] : memref<128x128xf32, #tpu.memory_space<vmem>>, vector<128x128xf32>
    %c0_1 = arith.constant 0 : index
    %c0_2 = arith.constant 0 : index
    %1 = vector.load %arg2[%c0_1, %c0_2] : memref<128x128xf32, #tpu.memory_space<vmem>>, vector<128x128xf32>
    %cst = arith.constant dense<0.000000e+00> : vector<128x128xf32>
    %2 = tpu.matmul %0, %1, %cst {dimension_numbers = #tpu.dot_dimension_numbers<[1], [0], [0], [1], [0, 0, 1, 1], [], []>} : vector<128x128xf32>, vector<128x128xf32>, vector<128x128xf32> -> vector<128x128xf32>
    %c0_3 = arith.constant 0 : index
    %c0_4 = arith.constant 0 : index
    %3 = vector.load %arg3[%c0_3, %c0_4] : memref<1x128xf32, #tpu.memory_space<vmem>>, vector<1x128xf32>
    %4 = vector.broadcast %3 : vector<1x128xf32> to vector<128x128xf32>
    %5 = arith.addf %2, %4 : vector<128x128xf32>
    %cst_5 = arith.constant 0.000000e+00 : f32
    %6 = vector.broadcast %cst_5 : f32 to vector<128x128xf32>
    %7 = arith.maximumf %5, %6 : vector<128x128xf32>
    %c0_6 = arith.constant 0 : index
    %c0_7 = arith.constant 0 : index
    %8 = vector.load %arg4[%c0_6, %c0_7] : memref<128x128xf32, #tpu.memory_space<vmem>>, vector<128x128xf32>
    %cst_8 = arith.constant dense<0.000000e+00> : vector<128x128xf32>
    %9 = tpu.matmul %7, %8, %cst_8 {dimension_numbers = #tpu.dot_dimension_numbers<[1], [0], [0], [1], [0, 0, 1, 1], [], []>} : vector<128x128xf32>, vector<128x128xf32>, vector<128x128xf32> -> vector<128x128xf32>
    %c0_9 = arith.constant 0 : index
    %c0_10 = arith.constant 0 : index
    %10 = vector.load %arg5[%c0_9, %c0_10] : memref<1x128xf32, #tpu.memory_space<vmem>>, vector<1x128xf32>
    %11 = vector.broadcast %10 : vector<1x128xf32> to vector<128x128xf32>
    %12 = arith.addf %9, %11 : vector<128x128xf32>
    %cst_11 = arith.constant 0.000000e+00 : f32
    %13 = vector.broadcast %cst_11 : f32 to vector<128x128xf32>
    %14 = arith.maximumf %12, %13 : vector<128x128xf32>
    %c0_12 = arith.constant 0 : index
    %c0_13 = arith.constant 0 : index
    %15 = vector.load %arg6[%c0_12, %c0_13] : memref<128x128xf32, #tpu.memory_space<vmem>>, vector<128x128xf32>
    %cst_14 = arith.constant dense<0.000000e+00> : vector<128x128xf32>
    %16 = tpu.matmul %14, %15, %cst_14 {dimension_numbers = #tpu.dot_dimension_numbers<[1], [0], [0], [1], [0, 0, 1, 1], [], []>} : vector<128x128xf32>, vector<128x128xf32>, vector<128x128xf32> -> vector<128x128xf32>
    %c0_15 = arith.constant 0 : index
    %c0_16 = arith.constant 0 : index
    %17 = vector.load %arg7[%c0_15, %c0_16] : memref<1x128xf32, #tpu.memory_space<vmem>>, vector<1x128xf32>
    %18 = vector.broadcast %17 : vector<1x128xf32> to vector<128x128xf32>
    %19 = arith.addf %16, %18 : vector<128x128xf32>
    %cst_17 = arith.constant 0.000000e+00 : f32
    %20 = vector.broadcast %cst_17 : f32 to vector<128x128xf32>
    %21 = arith.maximumf %19, %20 : vector<128x128xf32>
    %c0_18 = arith.constant 0 : index
    %c0_19 = arith.constant 0 : index
    %22 = vector.load %arg8[%c0_18, %c0_19] : memref<128x128xf32, #tpu.memory_space<vmem>>, vector<128x128xf32>
    %cst_20 = arith.constant dense<0.000000e+00> : vector<128x128xf32>
    %23 = tpu.matmul %21, %22, %cst_20 {dimension_numbers = #tpu.dot_dimension_numbers<[1], [0], [0], [1], [0, 0, 1, 1], [], []>} : vector<128x128xf32>, vector<128x128xf32>, vector<128x128xf32> -> vector<128x128xf32>
    %c0_21 = arith.constant 0 : index
    %c0_22 = arith.constant 0 : index
    %24 = vector.load %arg9[%c0_21, %c0_22] : memref<1x128xf32, #tpu.memory_space<vmem>>, vector<1x128xf32>
    %25 = vector.broadcast %24 : vector<1x128xf32> to vector<128x128xf32>
    %26 = arith.addf %23, %25 : vector<128x128xf32>
    %cst_23 = arith.constant 0.000000e+00 : f32
    %27 = vector.broadcast %cst_23 : f32 to vector<128x128xf32>
    %28 = arith.maximumf %26, %27 : vector<128x128xf32>
    %c0_24 = arith.constant 0 : index
    %c0_25 = arith.constant 0 : index
    %29 = vector.load %arg10[%c0_24, %c0_25] : memref<128x128xf32, #tpu.memory_space<vmem>>, vector<128x128xf32>
    %cst_26 = arith.constant dense<0.000000e+00> : vector<128x128xf32>
    %30 = tpu.matmul %28, %29, %cst_26 {dimension_numbers = #tpu.dot_dimension_numbers<[1], [0], [0], [1], [0, 0, 1, 1], [], []>} : vector<128x128xf32>, vector<128x128xf32>, vector<128x128xf32> -> vector<128x128xf32>
    %c0_27 = arith.constant 0 : index
    %c0_28 = arith.constant 0 : index
    %31 = vector.load %arg11[%c0_27, %c0_28] : memref<1x128xf32, #tpu.memory_space<vmem>>, vector<1x128xf32>
    %32 = vector.broadcast %31 : vector<1x128xf32> to vector<128x128xf32>
    %33 = arith.addf %30, %32 : vector<128x128xf32>
    %34 = tpu.iota {dimensions = array<i32: 1>} : vector<128x128xi32>
    %c10_i32 = arith.constant 10 : i32
    %35 = vector.broadcast %c10_i32 : i32 to vector<128x128xi32>
    %36 = arith.cmpi slt, %34, %35 : vector<128x128xi32>
    %cst_29 = arith.constant -1.000000e+30 : f32
    %37 = vector.broadcast %cst_29 : f32 to vector<128x128xf32>
    %38 = arith.select %36, %33, %37 : vector<128x128xi1>, vector<128x128xf32>
    %cst_30 = arith.constant dense<0xFF800000> : vector<128xf32>
    %39 = vector.multi_reduction <maximumf>, %38, %cst_30 [1] : vector<128x128xf32> to vector<128xf32>
    %40 = vector.shape_cast %39 : vector<128xf32> to vector<128x1xf32>
    %41 = vector.broadcast %40 : vector<128x1xf32> to vector<128x128xf32>
    %42 = arith.subf %38, %41 : vector<128x128xf32>
    %43 = math.exp %42 : vector<128x128xf32>
    %cst_31 = arith.constant dense<0.000000e+00> : vector<128xf32>
    %44 = vector.multi_reduction <add>, %43, %cst_31 [1] : vector<128x128xf32> to vector<128xf32>
    %45 = vector.shape_cast %44 : vector<128xf32> to vector<128x1xf32>
    %46 = math.log %45 : vector<128x1xf32>
    %47 = vector.broadcast %46 : vector<128x1xf32> to vector<128x128xf32>
    %48 = arith.subf %42, %47 : vector<128x128xf32>
    %c0_32 = arith.constant 0 : index
    %c0_33 = arith.constant 0 : index
    %49 = vector.load %arg12[%c0_32, %c0_33] : memref<128x128xf32, #tpu.memory_space<vmem>>, vector<128x128xf32>
    tpu.vector_store %arg12[%c0_32, %c0_33], %48 {strides = array<i32>} : memref<128x128xf32, #tpu.memory_space<vmem>>, vector<128x128xf32>,
    return
  }
  func.func @transform_0(%arg0: i32) -> (i32, i32) {
    %c0_i32 = arith.constant 0 : i32
    %c0_i32_0 = arith.constant 0 : i32
    return %arg0, %c0_i32 : i32, i32
  }
  func.func @transform_1(%arg0: i32) -> (i32, i32) {
    %c0_i32 = arith.constant 0 : i32
    %c0_i32_0 = arith.constant 0 : i32
    %c0_i32_1 = arith.constant 0 : i32
    return %c0_i32, %c0_i32_0 : i32, i32
  }
  func.func @transform_2(%arg0: i32) -> (i32, i32) {
    %c0_i32 = arith.constant 0 : i32
    %c0_i32_0 = arith.constant 0 : i32
    %c0_i32_1 = arith.constant 0 : i32
    return %c0_i32, %c0_i32_0 : i32, i32
  }
  func.func @transform_3(%arg0: i32) -> (i32, i32) {
    %c0_i32 = arith.constant 0 : i32
    %c0_i32_0 = arith.constant 0 : i32
    %c0_i32_1 = arith.constant 0 : i32
    return %c0_i32, %c0_i32_0 : i32, i32
  }
  func.func @transform_4(%arg0: i32) -> (i32, i32) {
    %c0_i32 = arith.constant 0 : i32
    %c0_i32_0 = arith.constant 0 : i32
    %c0_i32_1 = arith.constant 0 : i32
    return %c0_i32, %c0_i32_0 : i32, i32
  }
  func.func @transform_5(%arg0: i32) -> (i32, i32) {
    %c0_i32 = arith.constant 0 : i32
    %c0_i32_0 = arith.constant 0 : i32
    %c0_i32_1 = arith.constant 0 : i32
    return %c0_i32, %c0_i32_0 : i32, i32
  }
  func.func @transform_6(%arg0: i32) -> (i32, i32) {
    %c0_i32 = arith.constant 0 : i32
    %c0_i32_0 = arith.constant 0 : i32
    %c0_i32_1 = arith.constant 0 : i32
    return %c0_i32, %c0_i32_0 : i32, i32
  }
  func.func @transform_7(%arg0: i32) -> (i32, i32) {
    %c0_i32 = arith.constant 0 : i32
    %c0_i32_0 = arith.constant 0 : i32
    %c0_i32_1 = arith.constant 0 : i32
    return %c0_i32, %c0_i32_0 : i32, i32
  }
  func.func @transform_8(%arg0: i32) -> (i32, i32) {
    %c0_i32 = arith.constant 0 : i32
    %c0_i32_0 = arith.constant 0 : i32
    %c0_i32_1 = arith.constant 0 : i32
    return %c0_i32, %c0_i32_0 : i32, i32
  }
  func.func @transform_9(%arg0: i32) -> (i32, i32) {
    %c0_i32 = arith.constant 0 : i32
    %c0_i32_0 = arith.constant 0 : i32
    %c0_i32_1 = arith.constant 0 : i32
    return %c0_i32, %c0_i32_0 : i32, i32
  }
  func.func @transform_10(%arg0: i32) -> (i32, i32) {
    %c0_i32 = arith.constant 0 : i32
    %c0_i32_0 = arith.constant 0 : i32
    %c0_i32_1 = arith.constant 0 : i32
    return %c0_i32, %c0_i32_0 : i32, i32
  }
  func.func @transform_11(%arg0: i32) -> (i32, i32) {
    %c0_i32 = arith.constant 0 : i32
    %c0_i32_0 = arith.constant 0 : i32
    return %arg0, %c0_i32 : i32, i32
  }
}

</mosaic_0001>

<llo_original>
// kernel: tpu_custom_call.1
$region0: #{tpu_custom_call.1}
  #allocation0 [shape = 'u32[]', space=smem, size = 0x4, offset = 0x4, fixed_abs, tag = 'smem constant byte address 0x4 - core index']
  #allocation1 [shape = 'u32[72,128]{1,0:T(1,128)}', space=vmem, size = 0x9000, scoped, tag = 'internal scratch']
  %s0 = inlined_call_operand.hbm [shape: f32[256,128], index: 0, kind: input, shape index: {}]
  %s1 = inlined_call_operand.hbm [shape: f32[128,128], index: 1, kind: input, shape index: {}]
  %s2 = inlined_call_operand.vmem [shape: f32[1,128], index: 2, kind: input, shape index: {}]
  %s3 = inlined_call_operand.hbm [shape: f32[128,128], index: 3, kind: input, shape index: {}]
  %s4 = inlined_call_operand.vmem [shape: f32[1,128], index: 4, kind: input, shape index: {}]
  %s5 = inlined_call_operand.hbm [shape: f32[128,128], index: 5, kind: input, shape index: {}]
  %s6 = inlined_call_operand.vmem [shape: f32[1,128], index: 6, kind: input, shape index: {}]
  %s7 = inlined_call_operand.hbm [shape: f32[128,128], index: 7, kind: input, shape index: {}]
  %s8 = inlined_call_operand.vmem [shape: f32[1,128], index: 8, kind: input, shape index: {}]
  %s9 = inlined_call_operand.hbm [shape: f32[128,128], index: 9, kind: input, shape index: {}]
  %s10 = inlined_call_operand.vmem [shape: f32[1,128], index: 10, kind: input, shape index: {}]
  %s11 = inlined_call_operand.hbm [shape: f32[256,128], index: 11, kind: output, shape index: {}]
  %s12 = sld [smem:[#allocation0]]
  $region101: #{tpu_custom_call.1} parent=0
    _
  %s14 = ssub.s32 1, %s12
  %s15 = scalar_select 0, %s14, %s12
  $region1: #{tpu_custom_call.1} parent=0
    #allocation2 [shape = 'u8[131072]{0}', space=vmem, size = 0x20000, scoped, tag = 'input window, operand 0']
    #allocation3 [shape = 's32[2]{0}', space=sflag, size = 0x8, scoped, tag = 'scoped memory for tpu_custom_call.1']
    #allocation4 [shape = 's32[2]{0}', space=sflag, size = 0x8, scoped, tag = 'scoped memory for tpu_custom_call.1']
    #allocation5 [shape = 'u8[65536]{0}', space=vmem, size = 0x10000, scoped, tag = 'input window, operand 1, single buffered']
    #allocation6 [shape = 's32[1]{0}', space=sflag, size = 0x4, scoped, tag = 'scoped memory for tpu_custom_call.1']
    #allocation7 [shape = 'u8[65536]{0}', space=vmem, size = 0x10000, scoped, tag = 'input window, operand 3, single buffered']
    #allocation8 [shape = 'u8[65536]{0}', space=vmem, size = 0x10000, scoped, tag = 'input window, operand 5, single buffered']
    #allocation9 [shape = 's32[1]{0}', space=sflag, size = 0x4, scoped, tag = 'scoped memory for tpu_custom_call.1']
    #allocation10 [shape = 'u8[65536]{0}', space=vmem, size = 0x10000, scoped, tag = 'input window, operand 7, single buffered']
    #allocation11 [shape = 'u8[65536]{0}', space=vmem, size = 0x10000, scoped, tag = 'input window, operand 9, single buffered']
    #allocation12 [shape = 's32[1]{0}', space=sflag, size = 0x4, scoped, tag = 'scoped memory for tpu_custom_call.1']
    #allocation13 [shape = 'u8[131072]{0}', space=vmem, size = 0x20000, scoped, tag = 'output window, operand 0']
    %16 = vsyncpa [#allocation3], 0
    %s17 = scalar_lea.sflag [#allocation3], 1
    %18 = vsyncpa %s17, 0
    %19 = vsyncpa [#allocation6], 0
    %20 = vsyncpa [#allocation9], 0
    %21 = vsyncpa [#allocation12], 0
    %22 = vsyncpa [#allocation4], 0
    %s23 = scalar_lea.sflag [#allocation4], 1
    %24 = vsyncpa %s23, 0
    loop: start=0, step=1, limit=4
    $region2: #{tpu_custom_call.1} parent=1 // loop_pre_header
      _
    $region3: #{tpu_custom_call.1} parent=1 // loop_header
      %s26 = sphi 0, %s30
      %p27 = scmp.ge.s32.totalorder %s26, 4
      %s36 = sphi 0, %s38
      %s39 = sphi 0, %s36
      %s40 = sphi 0, %s39
      %s56 = sphi 0, %s40
      %s60 = sphi 0, %s60
      %s62 = sphi 0, %s60
      %s63 = sphi 0, %s62
      %s77 = sphi 0, %s63
      %s81 = sphi 0, %s81
      %s83 = sphi 0, %s81
      %s84 = sphi 0, %s83
      %s98 = sphi 0, %s84
      %s102 = sphi 0, %s102
      %s104 = sphi 0, %s102
      %s105 = sphi 0, %s104
      %s119 = sphi 0, %s105
      %s123 = sphi 0, %s123
      %s125 = sphi 0, %s123
      %s126 = sphi 0, %s125
      %s140 = sphi 0, %s126
      %s144 = sphi 0, %s144
      %s146 = sphi 0, %s144
      %s147 = sphi 0, %s146
      %s161 = sphi 0, %s147
      %s165 = sphi 0, %s165
      %s167 = sphi 0, %s165
      %s168 = sphi 0, %s167
      %s182 = sphi 0, %s168
      %s186 = sphi 0, %s186
      %s188 = sphi 0, %s186
      %s189 = sphi 0, %s188
      %s203 = sphi 0, %s189
      %s207 = sphi 0, %s207
      %s209 = sphi 0, %s207
      %s210 = sphi 0, %s209
      %s224 = sphi 0, %s210
      %s228 = sphi 0, %s228
      %s230 = sphi 0, %s228
      %s231 = sphi 0, %s230
      %s245 = sphi 0, %s231
      %s249 = sphi 0, %s249
      %s251 = sphi 0, %s249
      %s252 = sphi 0, %s251
      %s266 = sphi 0, %s252
      %s272 = sphi 0, %s274
      %s275 = sphi 0, %s272
      %s276 = sphi 0, %s275
      %s292 = sphi 0, %s276
    $region4: #{tpu_custom_call.1} parent=1 // loop_header_branch
      %29 = sbr.rel (%p27) target = $region8
    $region5: #{tpu_custom_call.1} parent=1 // loop_body
      %s31 = ssub.s32 %s26, 1
      %s32 = ssub.s32 %s26, 2
      %s33 = sadd.s32 %s26, 1
      %s34 = ssub.s32 %s26, %s33
      %p35 = scmp.eq.s32.totalorder %s34, 0
      %s37 = sadd.s32 %s36, 1
      %s38 = scalar_select %p35, %s36, %s37
      %p41 = pneg %p35
      %p42 = scmp.eq.s32.totalorder %s26, 1
      %p43 = por %p41, %p42
      %p44 = scmp.ne.s32.totalorder %s36, %s39
      %p45 = scmp.eq.s32.totalorder %s26, 0
      %p46 = por %p44, %p45
      %p47 = scmp.ne.s32.totalorder %s36, %s39
      %p48 = scmp.eq.s32.totalorder %s31, 1
      %p49 = por %p47, %p48
      %p50 = scmp.ne.s32.totalorder %s39, %s40
      %p51 = scmp.eq.s32.totalorder %s31, 0
      %p52 = por %p50, %p51
      %p53 = scmp.ne.s32.totalorder %s39, %s40
      %p54 = scmp.eq.s32.totalorder %s32, 1
      %p55 = por %p53, %p54
      %p57 = scmp.ne.s32.totalorder %s40, %s56
      %p58 = scmp.eq.s32.totalorder %s32, 0
      %p59 = por %p57, %p58
      %s61 = sadd.s32 %s60, 1
      %p64 = scmp.eq.s32.totalorder %s26, 1
      %p65 = scmp.ne.s32.totalorder %s60, %s62
      %p66 = scmp.eq.s32.totalorder %s26, 0
      %p67 = por %p65, %p66
      %p68 = scmp.ne.s32.totalorder %s60, %s62
      %p69 = scmp.eq.s32.totalorder %s31, 1
      %p70 = por %p68, %p69
      %p71 = scmp.ne.s32.totalorder %s62, %s63
      %p72 = scmp.eq.s32.totalorder %s31, 0
      %p73 = por %p71, %p72
      %p74 = scmp.ne.s32.totalorder %s62, %s63
      %p75 = scmp.eq.s32.totalorder %s32, 1
      %p76 = por %p74, %p75
      %p78 = scmp.ne.s32.totalorder %s63, %s77
      %p79 = scmp.eq.s32.totalorder %s32, 0
      %p80 = por %p78, %p79
      %s82 = sadd.s32 %s81, 1
      %p85 = scmp.eq.s32.totalorder %s26, 1
      %p86 = scmp.ne.s32.totalorder %s81, %s83
      %p87 = scmp.eq.s32.totalorder %s26, 0
      %p88 = por %p86, %p87
      %p89 = scmp.ne.s32.totalorder %s81, %s83
      %p90 = scmp.eq.s32.totalorder %s31, 1
      %p91 = por %p89, %p90
      %p92 = scmp.ne.s32.totalorder %s83, %s84
      %p93 = scmp.eq.s32.totalorder %s31, 0
      %p94 = por %p92, %p93
      %p95 = scmp.ne.s32.totalorder %s83, %s84
      %p96 = scmp.eq.s32.totalorder %s32, 1
      %p97 = por %p95, %p96
      %p99 = scmp.ne.s32.totalorder %s84, %s98
      %p100 = scmp.eq.s32.totalorder %s32, 0
      %p101 = por %p99, %p100
      %s103 = sadd.s32 %s102, 1
      %p106 = scmp.eq.s32.totalorder %s26, 1
      %p107 = scmp.ne.s32.totalorder %s102, %s104
      %p108 = scmp.eq.s32.totalorder %s26, 0
      %p109 = por %p107, %p108
      %p110 = scmp.ne.s32.totalorder %s102, %s104
      %p111 = scmp.eq.s32.totalorder %s31, 1
      %p112 = por %p110, %p111
      %p113 = scmp.ne.s32.totalorder %s104, %s105
      %p114 = scmp.eq.s32.totalorder %s31, 0
      %p115 = por %p113, %p114
      %p116 = scmp.ne.s32.totalorder %s104, %s105
      %p117 = scmp.eq.s32.totalorder %s32, 1
      %p118 = por %p116, %p117
      %p120 = scmp.ne.s32.totalorder %s105, %s119
      %p121 = scmp.eq.s32.totalorder %s32, 0
      %p122 = por %p120, %p121
      %s124 = sadd.s32 %s123, 1
      %p127 = scmp.eq.s32.totalorder %s26, 1
      %p128 = scmp.ne.s32.totalorder %s123, %s125
      %p129 = scmp.eq.s32.totalorder %s26, 0
      %p130 = por %p128, %p129
      %p131 = scmp.ne.s32.totalorder %s123, %s125
      %p132 = scmp.eq.s32.totalorder %s31, 1
      %p133 = por %p131, %p132
      %p134 = scmp.ne.s32.totalorder %s125, %s126
      %p135 = scmp.eq.s32.totalorder %s31, 0
      %p136 = por %p134, %p135
      %p137 = scmp.ne.s32.totalorder %s125, %s126
      %p138 = scmp.eq.s32.totalorder %s32, 1
      %p139 = por %p137, %p138
      %p141 = scmp.ne.s32.totalorder %s126, %s140
      %p142 = scmp.eq.s32.totalorder %s32, 0
      %p143 = por %p141, %p142
      %s145 = sadd.s32 %s144, 1
      %p148 = scmp.eq.s32.totalorder %s26, 1
      %p149 = scmp.ne.s32.totalorder %s144, %s146
      %p150 = scmp.eq.s32.totalorder %s26, 0
      %p151 = por %p149, %p150
      %p152 = scmp.ne.s32.totalorder %s144, %s146
      %p153 = scmp.eq.s32.totalorder %s31, 1
      %p154 = por %p152, %p153
      %p155 = scmp.ne.s32.totalorder %s146, %s147
      %p156 = scmp.eq.s32.totalorder %s31, 0
      %p157 = por %p155, %p156
      %p158 = scmp.ne.s32.totalorder %s146, %s147
      %p159 = scmp.eq.s32.totalorder %s32, 1
      %p160 = por %p158, %p159
      %p162 = scmp.ne.s32.totalorder %s147, %s161
      %p163 = scmp.eq.s32.totalorder %s32, 0
      %p164 = por %p162, %p163
      %s166 = sadd.s32 %s165, 1
      %p169 = scmp.eq.s32.totalorder %s26, 1
      %p170 = scmp.ne.s32.totalorder %s165, %s167
      %p171 = scmp.eq.s32.totalorder %s26, 0
      %p172 = por %p170, %p171
      %p173 = scmp.ne.s32.totalorder %s165, %s167
      %p174 = scmp.eq.s32.totalorder %s31, 1
      %p175 = por %p173, %p174
      %p176 = scmp.ne.s32.totalorder %s167, %s168
      %p177 = scmp.eq.s32.totalorder %s31, 0
      %p178 = por %p176, %p177
      %p179 = scmp.ne.s32.totalorder %s167, %s168
      %p180 = scmp.eq.s32.totalorder %s32, 1
      %p181 = por %p179, %p180
      %p183 = scmp.ne.s32.totalorder %s168, %s182
      %p184 = scmp.eq.s32.totalorder %s32, 0
      %p185 = por %p183, %p184
      %s187 = sadd.s32 %s186, 1
      %p190 = scmp.eq.s32.totalorder %s26, 1
      %p191 = scmp.ne.s32.totalorder %s186, %s188
      %p192 = scmp.eq.s32.totalorder %s26, 0
      %p193 = por %p191, %p192
      %p194 = scmp.ne.s32.totalorder %s186, %s188
      %p195 = scmp.eq.s32.totalorder %s31, 1
      %p196 = por %p194, %p195
      %p197 = scmp.ne.s32.totalorder %s188, %s189
      %p198 = scmp.eq.s32.totalorder %s31, 0
      %p199 = por %p197, %p198
      %p200 = scmp.ne.s32.totalorder %s188, %s189
      %p201 = scmp.eq.s32.totalorder %s32, 1
      %p202 = por %p200, %p201
      %p204 = scmp.ne.s32.totalorder %s189, %s203
      %p205 = scmp.eq.s32.totalorder %s32, 0
      %p206 = por %p204, %p205
      %s208 = sadd.s32 %s207, 1
      %p211 = scmp.eq.s32.totalorder %s26, 1
      %p212 = scmp.ne.s32.totalorder %s207, %s209
      %p213 = scmp.eq.s32.totalorder %s26, 0
      %p214 = por %p212, %p213
      %p215 = scmp.ne.s32.totalorder %s207, %s209
      %p216 = scmp.eq.s32.totalorder %s31, 1
      %p217 = por %p215, %p216
      %p218 = scmp.ne.s32.totalorder %s209, %s210
      %p219 = scmp.eq.s32.totalorder %s31, 0
      %p220 = por %p218, %p219
      %p221 = scmp.ne.s32.totalorder %s209, %s210
      %p222 = scmp.eq.s32.totalorder %s32, 1
      %p223 = por %p221, %p222
      %p225 = scmp.ne.s32.totalorder %s210, %s224
      %p226 = scmp.eq.s32.totalorder %s32, 0
      %p227 = por %p225, %p226
      %s229 = sadd.s32 %s228, 1
      %p232 = scmp.eq.s32.totalorder %s26, 1
      %p233 = scmp.ne.s32.totalorder %s228, %s230
      %p234 = scmp.eq.s32.totalorder %s26, 0
      %p235 = por %p233, %p234
      %p236 = scmp.ne.s32.totalorder %s228, %s230
      %p237 = scmp.eq.s32.totalorder %s31, 1
      %p238 = por %p236, %p237
      %p239 = scmp.ne.s32.totalorder %s230, %s231
      %p240 = scmp.eq.s32.totalorder %s31, 0
      %p241 = por %p239, %p240
      %p242 = scmp.ne.s32.totalorder %s230, %s231
      %p243 = scmp.eq.s32.totalorder %s32, 1
      %p244 = por %p242, %p243
      %p246 = scmp.ne.s32.totalorder %s231, %s245
      %p247 = scmp.eq.s32.totalorder %s32, 0
      %p248 = por %p246, %p247
      %s250 = sadd.s32 %s249, 1
      %p253 = scmp.eq.s32.totalorder %s26, 1
      %p254 = scmp.ne.s32.totalorder %s249, %s251
      %p255 = scmp.eq.s32.totalorder %s26, 0
      %p256 = por %p254, %p255
      %p257 = scmp.ne.s32.totalorder %s249, %s251
      %p258 = scmp.eq.s32.totalorder %s31, 1
      %p259 = por %p257, %p258
      %p260 = scmp.ne.s32.totalorder %s251, %s252
      %p261 = scmp.eq.s32.totalorder %s31, 0
      %p262 = por %p260, %p261
      %p263 = scmp.ne.s32.totalorder %s251, %s252
      %p264 = scmp.eq.s32.totalorder %s32, 1
      %p265 = por %p263, %p264
      %p267 = scmp.ne.s32.totalorder %s252, %s266
      %p268 = scmp.eq.s32.totalorder %s32, 0
      %p269 = por %p267, %p268
      %s270 = ssub.s32 %s26, %s33
      %p271 = scmp.eq.s32.totalorder %s270, 0
      %s273 = sadd.s32 %s272, 1
      %s274 = scalar_select %p271, %s272, %s273
      %p277 = pneg %p271
      %p278 = scmp.eq.s32.totalorder %s26, 1
      %p279 = por %p277, %p278
      %p280 = scmp.ne.s32.totalorder %s272, %s275
      %p281 = scmp.eq.s32.totalorder %s26, 0
      %p282 = por %p280, %p281
      %p283 = scmp.ne.s32.totalorder %s272, %s275
      %p284 = scmp.eq.s32.totalorder %s31, 1
      %p285 = por %p283, %p284
      %p286 = scmp.ne.s32.totalorder %s275, %s276
      %p287 = scmp.eq.s32.totalorder %s31, 0
      %p288 = por %p286, %p287
      %p289 = scmp.ne.s32.totalorder %s275, %s276
      %p290 = scmp.eq.s32.totalorder %s32, 1
      %p291 = por %p289, %p290
      %p293 = scmp.ne.s32.totalorder %s276, %s292
      %p294 = scmp.eq.s32.totalorder %s32, 0
      %p295 = por %p293, %p294
      %p296 = scmp.le.s32.totalorder 1, %s26
      %p297 = scmp.lt.s32.totalorder %s26, 3
      %p298 = pnand %p296, %p297
      %p299 = pneg %p298
      // Predicated region
      $region9: #{tpu_custom_call.1} parent=5 // pred_check
        _
      $region10: #{tpu_custom_call.1} parent=5 // pred_check_branch
        %301 = sbr.rel (%p298) target = $region12
      $region11: #{tpu_custom_call.1} parent=5 // pred_region
        %s302 = ssub.s32 %s26, 1
        // Predicated region
        $region13: #{tpu_custom_call.1} parent=11 // pred_check
          %p303 = pneg %p73
        $region14: #{tpu_custom_call.1} parent=11 // pred_check_branch
          %305 = sbr.rel (%p303) target = $region16
        $region15: #{tpu_custom_call.1} parent=11 // pred_region
          %307 = vsyncadd [#allocation6], 0
          %s308 = sshll.u32 %s1, 4
          %s309 = int_to_ptr.hbm [resolvable:$true] %s308
          %s310 = sshll.u32 [#allocation5], 4
          %s311 = int_to_ptr.vmem [resolvable:$true] %s310
          %316 = dma.hbm_to_vmem [thread:$0]  %s309, 2048, %s311, [#allocation6], 128, 128, 8
        $region16: #{tpu_custom_call.1} parent=11 // pred_fallthru
          _
        // Predicated region
        $region17: #{tpu_custom_call.1} parent=11 // pred_check
          %p317 = pneg %p94
        $region18: #{tpu_custom_call.1} parent=11 // pred_check_branch
          %319 = sbr.rel (%p317) target = $region20
        $region19: #{tpu_custom_call.1} parent=11 // pred_region
          _
        $region20: #{tpu_custom_call.1} parent=11 // pred_fallthru
          _
        // Predicated region
        $region21: #{tpu_custom_call.1} parent=11 // pred_check
          %p320 = pneg %p115
        $region22: #{tpu_custom_call.1} parent=11 // pred_check_branch
          %322 = sbr.rel (%p320) target = $region24
        $region23: #{tpu_custom_call.1} parent=11 // pred_region
          %324 = vsyncadd [#allocation6], 0
          %s325 = sshll.u32 %s3, 4
          %s326 = int_to_ptr.hbm [resolvable:$true] %s325
          %s327 = sshll.u32 [#allocation7], 4
          %s328 = int_to_ptr.vmem [resolvable:$true] %s327
          %333 = dma.hbm_to_vmem [thread:$0]  %s326, 2048, %s328, [#allocation6], 128, 128, 8
        $region24: #{tpu_custom_call.1} parent=11 // pred_fallthru
          _
        // Predicated region
        $region25: #{tpu_custom_call.1} parent=11 // pred_check
          %p334 = pneg %p136
        $region26: #{tpu_custom_call.1} parent=11 // pred_check_branch
          %336 = sbr.rel (%p334) target = $region28
        $region27: #{tpu_custom_call.1} parent=11 // pred_region
          _
        $region28: #{tpu_custom_call.1} parent=11 // pred_fallthru
          _
        // Predicated region
        $region29: #{tpu_custom_call.1} parent=11 // pred_check
          %p337 = pneg %p157
        $region30: #{tpu_custom_call.1} parent=11 // pred_check_branch
          %339 = sbr.rel (%p337) target = $region32
        $region31: #{tpu_custom_call.1} parent=11 // pred_region
          %341 = vsyncadd [#allocation9], 0
          %s342 = sshll.u32 %s5, 4
          %s343 = int_to_ptr.hbm [resolvable:$true] %s342
          %s344 = sshll.u32 [#allocation8], 4
          %s345 = int_to_ptr.vmem [resolvable:$true] %s344
          %350 = dma.hbm_to_vmem [thread:$0]  %s343, 2048, %s345, [#allocation9], 128, 128, 8
        $region32: #{tpu_custom_call.1} parent=11 // pred_fallthru
          _
        // Predicated region
        $region33: #{tpu_custom_call.1} parent=11 // pred_check
          %p351 = pneg %p178
        $region34: #{tpu_custom_call.1} parent=11 // pred_check_branch
          %353 = sbr.rel (%p351) target = $region36
        $region35: #{tpu_custom_call.1} parent=11 // pred_region
          _
        $region36: #{tpu_custom_call.1} parent=11 // pred_fallthru
          _
        // Predicated region
        $region37: #{tpu_custom_call.1} parent=11 // pred_check
          %p354 = pneg %p199
        $region38: #{tpu_custom_call.1} parent=11 // pred_check_branch
          %356 = sbr.rel (%p354) target = $region40
        $region39: #{tpu_custom_call.1} parent=11 // pred_region
          %358 = vsyncadd [#allocation9], 0
          %s359 = sshll.u32 %s7, 4
          %s360 = int_to_ptr.hbm [resolvable:$true] %s359
          %s361 = sshll.u32 [#allocation10], 4
          %s362 = int_to_ptr.vmem [resolvable:$true] %s361
          %367 = dma.hbm_to_vmem [thread:$0]  %s360, 2048, %s362, [#allocation9], 128, 128, 8
        $region40: #{tpu_custom_call.1} parent=11 // pred_fallthru
          _
        // Predicated region
        $region41: #{tpu_custom_call.1} parent=11 // pred_check
          %p368 = pneg %p220
        $region42: #{tpu_custom_call.1} parent=11 // pred_check_branch
          %370 = sbr.rel (%p368) target = $region44
        $region43: #{tpu_custom_call.1} parent=11 // pred_region
          _
        $region44: #{tpu_custom_call.1} parent=11 // pred_fallthru
          _
        // Predicated region
        $region45: #{tpu_custom_call.1} parent=11 // pred_check
          %p371 = pneg %p241
        $region46: #{tpu_custom_call.1} parent=11 // pred_check_branch
          %373 = sbr.rel (%p371) target = $region48
        $region47: #{tpu_custom_call.1} parent=11 // pred_region
          %375 = vsyncadd [#allocation12], 0
          %s376 = sshll.u32 %s9, 4
          %s377 = int_to_ptr.hbm [resolvable:$true] %s376
          %s378 = sshll.u32 [#allocation11], 4
          %s379 = int_to_ptr.vmem [resolvable:$true] %s378
          %384 = dma.hbm_to_vmem [thread:$0]  %s377, 2048, %s379, [#allocation12], 128, 128, 8
        $region48: #{tpu_custom_call.1} parent=11 // pred_fallthru
          _
        // Predicated region
        $region49: #{tpu_custom_call.1} parent=11 // pred_check
          %p385 = pneg %p262
        $region50: #{tpu_custom_call.1} parent=11 // pred_check_branch
          %387 = sbr.rel (%p385) target = $region52
        $region51: #{tpu_custom_call.1} parent=11 // pred_region
          _
        $region52: #{tpu_custom_call.1} parent=11 // pred_fallthru
          _
      $region12: #{tpu_custom_call.1} parent=5 // pred_fallthru
        _
      %p388 = scmp.lt.s32.totalorder %s26, 2
      // Predicated region
      $region53: #{tpu_custom_call.1} parent=5 // pred_check
        %p389 = pneg %p388
      $region54: #{tpu_custom_call.1} parent=5 // pred_check_branch
        %391 = sbr.rel (%p389) target = $region56
      $region55: #{tpu_custom_call.1} parent=5 // pred_region
        // Predicated region
        $region57: #{tpu_custom_call.1} parent=55 // pred_check
          %p392 = pneg %p46
        $region58: #{tpu_custom_call.1} parent=55 // pred_check_branch
          %394 = sbr.rel (%p392) target = $region60
        $region59: #{tpu_custom_call.1} parent=55 // pred_region
          %s395 = sand.u32 %s36, 1
          %s396 = scalar_lea.sflag [#allocation3], %s395
          %s397 = sand.u32 %s36, 1
          %s398 = smul.addr %s397, 128
          %s399 = scalar_lea.vmem [#allocation2], %s398
          %s400 = smul.u32 16, %s26
          %402 = vsyncadd %s396, 0
          %s403 = smul.addr %s400, 8
          %s404 = scalar_lea.hbm %s0, %s403
          %s405 = sshll.u32 %s404, 4
          %s406 = int_to_ptr.hbm [resolvable:$true] %s405
          %s407 = sshll.u32 %s399, 4
          %s408 = int_to_ptr.vmem [resolvable:$true] %s407
          %413 = dma.hbm_to_vmem [thread:$0]  %s406, 2048, %s408, %s396, 128, 128, 8
        $region60: #{tpu_custom_call.1} parent=55 // pred_fallthru
          _
      $region56: #{tpu_custom_call.1} parent=5 // pred_fallthru
        _
      %p414 = scmp.le.s32.totalorder 1, %s26
      %p415 = scmp.lt.s32.totalorder %s26, 3
      %p416 = pnand %p414, %p415
      %p417 = pneg %p416
      // Predicated region
      $region61: #{tpu_custom_call.1} parent=5 // pred_check
        _
      $region62: #{tpu_custom_call.1} parent=5 // pred_check_branch
        %419 = sbr.rel (%p416) target = $region64
      $region63: #{tpu_custom_call.1} parent=5 // pred_region
        %s420 = ssub.s32 %s26, 1
        %s421 = sand.u32 %s39, 1
        %s422 = scalar_lea.sflag [#allocation3], %s421
        %s423 = sand.u32 %s39, 1
        %s424 = smul.addr %s423, 128
        %s425 = scalar_lea.vmem [#allocation2], %s424
        // Predicated region
        $region65: #{tpu_custom_call.1} parent=63 // pred_check
          %p426 = pneg %p52
        $region66: #{tpu_custom_call.1} parent=63 // pred_check_branch
          %428 = sbr.rel (%p426) target = $region68
        $region67: #{tpu_custom_call.1} parent=63 // pred_region
          %430 = dma.done %s422, 2048
        $region68: #{tpu_custom_call.1} parent=63 // pred_fallthru
          _
        // Predicated region
        $region69: #{tpu_custom_call.1} parent=63 // pred_check
          %p431 = pneg %p73
        $region70: #{tpu_custom_call.1} parent=63 // pred_check_branch
          %433 = sbr.rel (%p431) target = $region72
        $region71: #{tpu_custom_call.1} parent=63 // pred_region
          %435 = dma.done [#allocation6], 2048
        $region72: #{tpu_custom_call.1} parent=63 // pred_fallthru
          _
        // Predicated region
        $region73: #{tpu_custom_call.1} parent=63 // pred_check
          %p436 = pneg %p115
        $region74: #{tpu_custom_call.1} parent=63 // pred_check_branch
          %438 = sbr.rel (%p436) target = $region76
        $region75: #{tpu_custom_call.1} parent=63 // pred_region
          %440 = dma.done [#allocation6], 2048
        $region76: #{tpu_custom_call.1} parent=63 // pred_fallthru
          _
        // Predicated region
        $region77: #{tpu_custom_call.1} parent=63 // pred_check
          %p441 = pneg %p157
        $region78: #{tpu_custom_call.1} parent=63 // pred_check_branch
          %443 = sbr.rel (%p441) target = $region80
        $region79: #{tpu_custom_call.1} parent=63 // pred_region
          %445 = dma.done [#allocation9], 2048
        $region80: #{tpu_custom_call.1} parent=63 // pred_fallthru
          _
        // Predicated region
        $region81: #{tpu_custom_call.1} parent=63 // pred_check
          %p446 = pneg %p199
        $region82: #{tpu_custom_call.1} parent=63 // pred_check_branch
          %448 = sbr.rel (%p446) target = $region84
        $region83: #{tpu_custom_call.1} parent=63 // pred_region
          %450 = dma.done [#allocation9], 2048
        $region84: #{tpu_custom_call.1} parent=63 // pred_fallthru
          _
        // Predicated region
        $region85: #{tpu_custom_call.1} parent=63 // pred_check
          %p451 = pneg %p241
        $region86: #{tpu_custom_call.1} parent=63 // pred_check_branch
          %453 = sbr.rel (%p451) target = $region88
        $region87: #{tpu_custom_call.1} parent=63 // pred_region
          %455 = dma.done [#allocation12], 2048
        $region88: #{tpu_custom_call.1} parent=63 // pred_fallthru
          _
        %s456 = sand.u32 %s39, 1
        %s457 = scalar_lea.sflag [#allocation3], %s456
        %s458 = sand.u32 %s39, 1
        %s459 = smul.addr %s458, 128
        %s460 = scalar_lea.vmem [#allocation2], %s459
        %p461 = pneg %p52
        %p462 = pneg %p49
        %p463 = pneg %p73
        %p464 = pneg %p70
        %p465 = pneg %p94
        %p466 = pneg %p91
        %p467 = pneg %p115
        %p468 = pneg %p112
        %p469 = pneg %p136
        %p470 = pneg %p133
        %p471 = pneg %p157
        %p472 = pneg %p154
        %p473 = pneg %p178
        %p474 = pneg %p175
        %p475 = pneg %p199
        %p476 = pneg %p196
        %p477 = pneg %p220
        %p478 = pneg %p217
        %p479 = pneg %p241
        %p480 = pneg %p238
        %p481 = pneg %p262
        %p482 = pneg %p259
        %p483 = pneg %p288
        %p484 = pneg %p285
        %s485 = sand.u32 %s275, 1
        %s486 = scalar_lea.sflag [#allocation4], %s485
        %s487 = sand.u32 %s275, 1
        %s488 = smul.addr %s487, 128
        %s489 = scalar_lea.vmem [#allocation13], %s488
        %s490 = smul.u32 16, %s31
        %s491 = smul.u32 16, %s31
        %v492 = vld [vmem:[%s425] sm:$0xff]
        %v493 = vld [vmem:[%s425 + $0x8] sm:$0xff]
        %v494 = vld [vmem:[%s425 + $0x10] sm:$0xff]
        %v495 = vld [vmem:[%s425 + $0x18] sm:$0xff]
        %v496 = vld [vmem:[%s425 + $0x20] sm:$0xff]
        %v497 = vld [vmem:[%s425 + $0x28] sm:$0xff]
        %v498 = vld [vmem:[%s425 + $0x30] sm:$0xff]
        %v499 = vld [vmem:[%s425 + $0x38] sm:$0xff]
        %v500 = vld [vmem:[%s425 + $0x40] sm:$0xff]
        %v501 = vld [vmem:[%s425 + $0x48] sm:$0xff]
        %v502 = vld [vmem:[%s425 + $0x50] sm:$0xff]
        %v503 = vld [vmem:[%s425 + $0x58] sm:$0xff]
        %v504 = vld [vmem:[%s425 + $0x60] sm:$0xff]
        %v505 = vld [vmem:[%s425 + $0x68] sm:$0xff]
        %v506 = vld [vmem:[%s425 + $0x70] sm:$0xff]
        %v507 = vld [vmem:[%s425 + $0x78] sm:$0xff]
        %v508 = vld [vmem:[#allocation5] sm:$0xff]
        %v509 = vld [vmem:[#allocation5 + $0x8] sm:$0xff]
        %v510 = vld [vmem:[#allocation5 + $0x10] sm:$0xff]
        %v511 = vld [vmem:[#allocation5 + $0x18] sm:$0xff]
        %v512 = vld [vmem:[#allocation5 + $0x20] sm:$0xff]
        %v513 = vld [vmem:[#allocation5 + $0x28] sm:$0xff]
        %v514 = vld [vmem:[#allocation5 + $0x30] sm:$0xff]
        %v515 = vld [vmem:[#allocation5 + $0x38] sm:$0xff]
        %v516 = vld [vmem:[#allocation5 + $0x40] sm:$0xff]
        %v517 = vld [vmem:[#allocation5 + $0x48] sm:$0xff]
        %v518 = vld [vmem:[#allocation5 + $0x50] sm:$0xff]
        %v519 = vld [vmem:[#allocation5 + $0x58] sm:$0xff]
        %v520 = vld [vmem:[#allocation5 + $0x60] sm:$0xff]
        %v521 = vld [vmem:[#allocation5 + $0x68] sm:$0xff]
        %v522 = vld [vmem:[#allocation5 + $0x70] sm:$0xff]
        %v523 = vld [vmem:[#allocation5 + $0x78] sm:$0xff]
        %v524 = vld [vmem:[%s2] sm:$0x1]
        %v526 = vperm.slane %v524, 0
        %528 = vmatpush.msra.mxu0 %v523
        %529 = vmatpush.msra.mxu0 %v522
        %530 = vmatpush.msra.mxu0 %v521
        %531 = vmatpush.msra.mxu0 %v520
        %532 = vmatpush.msra.mxu0 %v519
        %533 = vmatpush.msra.mxu0 %v518
        %534 = vmatpush.msra.mxu0 %v517
        %535 = vmatpush.msra.mxu0 %v516
        %536 = vmatpush.msra.mxu0 %v515
        %537 = vmatpush.msra.mxu0 %v514
        %538 = vmatpush.msra.mxu0 %v513
        %539 = vmatpush.msra.mxu0 %v512
        %540 = vmatpush.msra.mxu0 %v511
        %541 = vmatpush.msra.mxu0 %v510
        %542 = vmatpush.msra.mxu0 %v509
        %543 = vmatpush.msra.mxu0 %v508
        %544 = vmatmul.f32.gmra.mxu0 %v492
        %v545 = vpop.f32.mrf.mxu0
        %v546 = vadd.f32 %v526, %v545
        %547 = vmatmul.f32.gmra.mxu0 %v493
        %v548 = vpop.f32.mrf.mxu0
        %v549 = vadd.f32 %v526, %v548
        %550 = vmatmul.f32.gmra.mxu0 %v494
        %v551 = vpop.f32.mrf.mxu0
        %v552 = vadd.f32 %v526, %v551
        %553 = vmatmul.f32.gmra.mxu0 %v495
        %v554 = vpop.f32.mrf.mxu0
        %v555 = vadd.f32 %v526, %v554
        %556 = vmatmul.f32.gmra.mxu0 %v496
        %v557 = vpop.f32.mrf.mxu0
        %v558 = vadd.f32 %v526, %v557
        %559 = vmatmul.f32.gmra.mxu0 %v497
        %v560 = vpop.f32.mrf.mxu0
        %v561 = vadd.f32 %v526, %v560
        %562 = vmatmul.f32.gmra.mxu0 %v498
        %v563 = vpop.f32.mrf.mxu0
        %v564 = vadd.f32 %v526, %v563
        %565 = vmatmul.f32.gmra.mxu0 %v499
        %v566 = vpop.f32.mrf.mxu0
        %v567 = vadd.f32 %v526, %v566
        %568 = vmatmul.f32.gmra.mxu0 %v500
        %v569 = vpop.f32.mrf.mxu0
        %v570 = vadd.f32 %v526, %v569
        %571 = vmatmul.f32.gmra.mxu0 %v501
        %v572 = vpop.f32.mrf.mxu0
        %v573 = vadd.f32 %v526, %v572
        %574 = vmatmul.f32.gmra.mxu0 %v502
        %v575 = vpop.f32.mrf.mxu0
        %v576 = vadd.f32 %v526, %v575
        %577 = vmatmul.f32.gmra.mxu0 %v503
        %v578 = vpop.f32.mrf.mxu0
        %v579 = vadd.f32 %v526, %v578
        %580 = vmatmul.f32.gmra.mxu0 %v504
        %v581 = vpop.f32.mrf.mxu0
        %v582 = vadd.f32 %v526, %v581
        %583 = vmatmul.f32.gmra.mxu0 %v505
        %v584 = vpop.f32.mrf.mxu0
        %v585 = vadd.f32 %v526, %v584
        %586 = vmatmul.f32.gmra.mxu0 %v506
        %v587 = vpop.f32.mrf.mxu0
        %v588 = vadd.f32 %v526, %v587
        %589 = vmatmul.f32.gmra.mxu0 %v507
        %v590 = vpop.f32.mrf.mxu0
        %v591 = vadd.f32 %v526, %v590
        %592 = vdwg.mxu0
        %v593 = vmax.f32 %v546, 0.0
        %v594 = vmax.f32 %v549, 0.0
        %v595 = vmax.f32 %v552, 0.0
        %v596 = vmax.f32 %v555, 0.0
        %v597 = vmax.f32 %v558, 0.0
        %v598 = vmax.f32 %v561, 0.0
        %v599 = vmax.f32 %v564, 0.0
        %v600 = vmax.f32 %v567, 0.0
        %v601 = vmax.f32 %v570, 0.0
        %v602 = vmax.f32 %v573, 0.0
        %v603 = vmax.f32 %v576, 0.0
        %v604 = vmax.f32 %v579, 0.0
        %v605 = vmax.f32 %v582, 0.0
        %v606 = vmax.f32 %v585, 0.0
        %v607 = vmax.f32 %v588, 0.0
        %v608 = vmax.f32 %v591, 0.0
        %v609 = vld [vmem:[#allocation7] sm:$0xff]
        %v610 = vld [vmem:[#allocation7 + $0x8] sm:$0xff]
        %v611 = vld [vmem:[#allocation7 + $0x10] sm:$0xff]
        %v612 = vld [vmem:[#allocation7 + $0x18] sm:$0xff]
        %v613 = vld [vmem:[#allocation7 + $0x20] sm:$0xff]
        %v614 = vld [vmem:[#allocation7 + $0x28] sm:$0xff]
        %v615 = vld [vmem:[#allocation7 + $0x30] sm:$0xff]
        %v616 = vld [vmem:[#allocation7 + $0x38] sm:$0xff]
        %v617 = vld [vmem:[#allocation7 + $0x40] sm:$0xff]
        %v618 = vld [vmem:[#allocation7 + $0x48] sm:$0xff]
        %v619 = vld [vmem:[#allocation7 + $0x50] sm:$0xff]
        %v620 = vld [vmem:[#allocation7 + $0x58] sm:$0xff]
        %v621 = vld [vmem:[#allocation7 + $0x60] sm:$0xff]
        %v622 = vld [vmem:[#allocation7 + $0x68] sm:$0xff]
        %v623 = vld [vmem:[#allocation7 + $0x70] sm:$0xff]
        %v624 = vld [vmem:[#allocation7 + $0x78] sm:$0xff]
        %v625 = vld [vmem:[%s4] sm:$0x1]
        %v627 = vperm.slane %v625, 0
        %629 = vmatpush.msra.mxu0 %v624
        %630 = vmatpush.msra.mxu0 %v623
        %631 = vmatpush.msra.mxu0 %v622
        %632 = vmatpush.msra.mxu0 %v621
        %633 = vmatpush.msra.mxu0 %v620
        %634 = vmatpush.msra.mxu0 %v619
        %635 = vmatpush.msra.mxu0 %v618
        %636 = vmatpush.msra.mxu0 %v617
        %637 = vmatpush.msra.mxu0 %v616
        %638 = vmatpush.msra.mxu0 %v615
        %639 = vmatpush.msra.mxu0 %v614
        %640 = vmatpush.msra.mxu0 %v613
        %641 = vmatpush.msra.mxu0 %v612
        %642 = vmatpush.msra.mxu0 %v611
        %643 = vmatpush.msra.mxu0 %v610
        %644 = vmatpush.msra.mxu0 %v609
        %645 = vmatmul.f32.gmra.mxu0 %v593
        %v646 = vpop.f32.mrf.mxu0
        %v647 = vadd.f32 %v627, %v646
        %648 = vmatmul.f32.gmra.mxu0 %v594
        %v649 = vpop.f32.mrf.mxu0
        %v650 = vadd.f32 %v627, %v649
        %651 = vmatmul.f32.gmra.mxu0 %v595
        %v652 = vpop.f32.mrf.mxu0
        %v653 = vadd.f32 %v627, %v652
        %654 = vmatmul.f32.gmra.mxu0 %v596
        %v655 = vpop.f32.mrf.mxu0
        %v656 = vadd.f32 %v627, %v655
        %657 = vmatmul.f32.gmra.mxu0 %v597
        %v658 = vpop.f32.mrf.mxu0
        %v659 = vadd.f32 %v627, %v658
        %660 = vmatmul.f32.gmra.mxu0 %v598
        %v661 = vpop.f32.mrf.mxu0
        %v662 = vadd.f32 %v627, %v661
        %663 = vmatmul.f32.gmra.mxu0 %v599
        %v664 = vpop.f32.mrf.mxu0
        %v665 = vadd.f32 %v627, %v664
        %666 = vmatmul.f32.gmra.mxu0 %v600
        %v667 = vpop.f32.mrf.mxu0
        %v668 = vadd.f32 %v627, %v667
        %669 = vmatmul.f32.gmra.mxu0 %v601
        %v670 = vpop.f32.mrf.mxu0
        %v671 = vadd.f32 %v627, %v670
        %672 = vmatmul.f32.gmra.mxu0 %v602
        %v673 = vpop.f32.mrf.mxu0
        %v674 = vadd.f32 %v627, %v673
        %675 = vmatmul.f32.gmra.mxu0 %v603
        %v676 = vpop.f32.mrf.mxu0
        %v677 = vadd.f32 %v627, %v676
        %678 = vmatmul.f32.gmra.mxu0 %v604
        %v679 = vpop.f32.mrf.mxu0
        %v680 = vadd.f32 %v627, %v679
        %681 = vmatmul.f32.gmra.mxu0 %v605
        %v682 = vpop.f32.mrf.mxu0
        %v683 = vadd.f32 %v627, %v682
        %684 = vmatmul.f32.gmra.mxu0 %v606
        %v685 = vpop.f32.mrf.mxu0
        %v686 = vadd.f32 %v627, %v685
        %687 = vmatmul.f32.gmra.mxu0 %v607
        %v688 = vpop.f32.mrf.mxu0
        %v689 = vadd.f32 %v627, %v688
        %690 = vmatmul.f32.gmra.mxu0 %v608
        %v691 = vpop.f32.mrf.mxu0
        %v692 = vadd.f32 %v627, %v691
        %693 = vdwg.mxu0
        %v694 = vmax.f32 %v647, 0.0
        %v695 = vmax.f32 %v650, 0.0
        %v696 = vmax.f32 %v653, 0.0
        %v697 = vmax.f32 %v656, 0.0
        %v698 = vmax.f32 %v659, 0.0
        %v699 = vmax.f32 %v662, 0.0
        %v700 = vmax.f32 %v665, 0.0
        %v701 = vmax.f32 %v668, 0.0
        %v702 = vmax.f32 %v671, 0.0
        %v703 = vmax.f32 %v674, 0.0
        %v704 = vmax.f32 %v677, 0.0
        %v705 = vmax.f32 %v680, 0.0
        %v706 = vmax.f32 %v683, 0.0
        %v707 = vmax.f32 %v686, 0.0
        %v708 = vmax.f32 %v689, 0.0
        %v709 = vmax.f32 %v692, 0.0
        %v710 = vld [vmem:[#allocation8] sm:$0xff]
        %v711 = vld [vmem:[#allocation8 + $0x8] sm:$0xff]
        %v712 = vld [vmem:[#allocation8 + $0x10] sm:$0xff]
        %v713 = vld [vmem:[#allocation8 + $0x18] sm:$0xff]
        %v714 = vld [vmem:[#allocation8 + $0x20] sm:$0xff]
        %v715 = vld [vmem:[#allocation8 + $0x28] sm:$0xff]
        %v716 = vld [vmem:[#allocation8 + $0x30] sm:$0xff]
        %v717 = vld [vmem:[#allocation8 + $0x38] sm:$0xff]
        %v718 = vld [vmem:[#allocation8 + $0x40] sm:$0xff]
        %v719 = vld [vmem:[#allocation8 + $0x48] sm:$0xff]
        %v720 = vld [vmem:[#allocation8 + $0x50] sm:$0xff]
        %v721 = vld [vmem:[#allocation8 + $0x58] sm:$0xff]
        %v722 = vld [vmem:[#allocation8 + $0x60] sm:$0xff]
        %v723 = vld [vmem:[#allocation8 + $0x68] sm:$0xff]
        %v724 = vld [vmem:[#allocation8 + $0x70] sm:$0xff]
        %v725 = vld [vmem:[#allocation8 + $0x78] sm:$0xff]
        %v726 = vld [vmem:[%s6] sm:$0x1]
        %v728 = vperm.slane %v726, 0
        %730 = vmatpush.msra.mxu0 %v725
        %731 = vmatpush.msra.mxu0 %v724
        %732 = vmatpush.msra.mxu0 %v723
        %733 = vmatpush.msra.mxu0 %v722
        %734 = vmatpush.msra.mxu0 %v721
        %735 = vmatpush.msra.mxu0 %v720
        %736 = vmatpush.msra.mxu0 %v719
        %737 = vmatpush.msra.mxu0 %v718
        %738 = vmatpush.msra.mxu0 %v717
        %739 = vmatpush.msra.mxu0 %v716
        %740 = vmatpush.msra.mxu0 %v715
        %741 = vmatpush.msra.mxu0 %v714
        %742 = vmatpush.msra.mxu0 %v713
        %743 = vmatpush.msra.mxu0 %v712
        %744 = vmatpush.msra.mxu0 %v711
        %745 = vmatpush.msra.mxu0 %v710
        %746 = vmatmul.f32.gmra.mxu0 %v694
        %v747 = vpop.f32.mrf.mxu0
        %v748 = vadd.f32 %v728, %v747
        %749 = vmatmul.f32.gmra.mxu0 %v695
        %v750 = vpop.f32.mrf.mxu0
        %v751 = vadd.f32 %v728, %v750
        %752 = vmatmul.f32.gmra.mxu0 %v696
        %v753 = vpop.f32.mrf.mxu0
        %v754 = vadd.f32 %v728, %v753
        %755 = vmatmul.f32.gmra.mxu0 %v697
        %v756 = vpop.f32.mrf.mxu0
        %v757 = vadd.f32 %v728, %v756
        %758 = vmatmul.f32.gmra.mxu0 %v698
        %v759 = vpop.f32.mrf.mxu0
        %v760 = vadd.f32 %v728, %v759
        %761 = vmatmul.f32.gmra.mxu0 %v699
        %v762 = vpop.f32.mrf.mxu0
        %v763 = vadd.f32 %v728, %v762
        %764 = vmatmul.f32.gmra.mxu0 %v700
        %v765 = vpop.f32.mrf.mxu0
        %v766 = vadd.f32 %v728, %v765
        %767 = vmatmul.f32.gmra.mxu0 %v701
        %v768 = vpop.f32.mrf.mxu0
        %v769 = vadd.f32 %v728, %v768
        %770 = vmatmul.f32.gmra.mxu0 %v702
        %v771 = vpop.f32.mrf.mxu0
        %v772 = vadd.f32 %v728, %v771
        %773 = vmatmul.f32.gmra.mxu0 %v703
        %v774 = vpop.f32.mrf.mxu0
        %v775 = vadd.f32 %v728, %v774
        %776 = vmatmul.f32.gmra.mxu0 %v704
        %v777 = vpop.f32.mrf.mxu0
        %v778 = vadd.f32 %v728, %v777
        %779 = vmatmul.f32.gmra.mxu0 %v705
        %v780 = vpop.f32.mrf.mxu0
        %v781 = vadd.f32 %v728, %v780
        %782 = vmatmul.f32.gmra.mxu0 %v706
        %v783 = vpop.f32.mrf.mxu0
        %v784 = vadd.f32 %v728, %v783
        %785 = vmatmul.f32.gmra.mxu0 %v707
        %v786 = vpop.f32.mrf.mxu0
        %v787 = vadd.f32 %v728, %v786
        %788 = vmatmul.f32.gmra.mxu0 %v708
        %v789 = vpop.f32.mrf.mxu0
        %v790 = vadd.f32 %v728, %v789
        %791 = vmatmul.f32.gmra.mxu0 %v709
        %v792 = vpop.f32.mrf.mxu0
        %v793 = vadd.f32 %v728, %v792
        %794 = vdwg.mxu0
        %v795 = vmax.f32 %v748, 0.0
        %v796 = vmax.f32 %v751, 0.0
        %v797 = vmax.f32 %v754, 0.0
        %v798 = vmax.f32 %v757, 0.0
        %v799 = vmax.f32 %v760, 0.0
        %v800 = vmax.f32 %v763, 0.0
        %v801 = vmax.f32 %v766, 0.0
        %v802 = vmax.f32 %v769, 0.0
        %v803 = vmax.f32 %v772, 0.0
        %v804 = vmax.f32 %v775, 0.0
        %v805 = vmax.f32 %v778, 0.0
        %v806 = vmax.f32 %v781, 0.0
        %v807 = vmax.f32 %v784, 0.0
        %v808 = vmax.f32 %v787, 0.0
        %v809 = vmax.f32 %v790, 0.0
        %v810 = vmax.f32 %v793, 0.0
        %v811 = vld [vmem:[#allocation10] sm:$0xff]
        %v812 = vld [vmem:[#allocation10 + $0x8] sm:$0xff]
        %v813 = vld [vmem:[#allocation10 + $0x10] sm:$0xff]
        %v814 = vld [vmem:[#allocation10 + $0x18] sm:$0xff]
        %v815 = vld [vmem:[#allocation10 + $0x20] sm:$0xff]
        %v816 = vld [vmem:[#allocation10 + $0x28] sm:$0xff]
        %v817 = vld [vmem:[#allocation10 + $0x30] sm:$0xff]
        %v818 = vld [vmem:[#allocation10 + $0x38] sm:$0xff]
        %v819 = vld [vmem:[#allocation10 + $0x40] sm:$0xff]
        %v820 = vld [vmem:[#allocation10 + $0x48] sm:$0xff]
        %v821 = vld [vmem:[#allocation10 + $0x50] sm:$0xff]
        %v822 = vld [vmem:[#allocation10 + $0x58] sm:$0xff]
        %v823 = vld [vmem:[#allocation10 + $0x60] sm:$0xff]
        %v824 = vld [vmem:[#allocation10 + $0x68] sm:$0xff]
        %v825 = vld [vmem:[#allocation10 + $0x70] sm:$0xff]
        %v826 = vld [vmem:[#allocation10 + $0x78] sm:$0xff]
        %v827 = vld [vmem:[%s8] sm:$0x1]
        %v829 = vperm.slane %v827, 0
        %831 = vmatpush.msra.mxu0 %v826
        %832 = vmatpush.msra.mxu0 %v825
        %833 = vmatpush.msra.mxu0 %v824
        %834 = vmatpush.msra.mxu0 %v823
        %835 = vmatpush.msra.mxu0 %v822
        %836 = vmatpush.msra.mxu0 %v821
        %837 = vmatpush.msra.mxu0 %v820
        %838 = vmatpush.msra.mxu0 %v819
        %839 = vmatpush.msra.mxu0 %v818
        %840 = vmatpush.msra.mxu0 %v817
        %841 = vmatpush.msra.mxu0 %v816
        %842 = vmatpush.msra.mxu0 %v815
        %843 = vmatpush.msra.mxu0 %v814
        %844 = vmatpush.msra.mxu0 %v813
        %845 = vmatpush.msra.mxu0 %v812
        %846 = vmatpush.msra.mxu0 %v811
        %847 = vmatmul.f32.gmra.mxu0 %v795
        %v848 = vpop.f32.mrf.mxu0
        %v849 = vadd.f32 %v829, %v848
        %850 = vmatmul.f32.gmra.mxu0 %v796
        %v851 = vpop.f32.mrf.mxu0
        %v852 = vadd.f32 %v829, %v851
        %853 = vmatmul.f32.gmra.mxu0 %v797
        %v854 = vpop.f32.mrf.mxu0
        %v855 = vadd.f32 %v829, %v854
        %856 = vmatmul.f32.gmra.mxu0 %v798
        %v857 = vpop.f32.mrf.mxu0
        %v858 = vadd.f32 %v829, %v857
        %859 = vmatmul.f32.gmra.mxu0 %v799
        %v860 = vpop.f32.mrf.mxu0
        %v861 = vadd.f32 %v829, %v860
        %862 = vmatmul.f32.gmra.mxu0 %v800
        %v863 = vpop.f32.mrf.mxu0
        %v864 = vadd.f32 %v829, %v863
        %865 = vmatmul.f32.gmra.mxu0 %v801
        %v866 = vpop.f32.mrf.mxu0
        %v867 = vadd.f32 %v829, %v866
        %868 = vmatmul.f32.gmra.mxu0 %v802
        %v869 = vpop.f32.mrf.mxu0
        %v870 = vadd.f32 %v829, %v869
        %871 = vmatmul.f32.gmra.mxu0 %v803
        %v872 = vpop.f32.mrf.mxu0
        %v873 = vadd.f32 %v829, %v872
        %874 = vmatmul.f32.gmra.mxu0 %v804
        %v875 = vpop.f32.mrf.mxu0
        %v876 = vadd.f32 %v829, %v875
        %877 = vmatmul.f32.gmra.mxu0 %v805
        %v878 = vpop.f32.mrf.mxu0
        %v879 = vadd.f32 %v829, %v878
        %880 = vmatmul.f32.gmra.mxu0 %v806
        %v881 = vpop.f32.mrf.mxu0
        %v882 = vadd.f32 %v829, %v881
        %883 = vmatmul.f32.gmra.mxu0 %v807
        %v884 = vpop.f32.mrf.mxu0
        %v885 = vadd.f32 %v829, %v884
        %886 = vmatmul.f32.gmra.mxu0 %v808
        %v887 = vpop.f32.mrf.mxu0
        %v888 = vadd.f32 %v829, %v887
        %889 = vmatmul.f32.gmra.mxu0 %v809
        %v890 = vpop.f32.mrf.mxu0
        %v891 = vadd.f32 %v829, %v890
        %892 = vmatmul.f32.gmra.mxu0 %v810
        %v893 = vpop.f32.mrf.mxu0
        %v894 = vadd.f32 %v829, %v893
        %895 = vdwg.mxu0
        %v896 = vmax.f32 %v849, 0.0
        %v897 = vmax.f32 %v852, 0.0
        %v898 = vmax.f32 %v855, 0.0
        %v899 = vmax.f32 %v858, 0.0
        %v900 = vmax.f32 %v861, 0.0
        %v901 = vmax.f32 %v864, 0.0
        %v902 = vmax.f32 %v867, 0.0
        %v903 = vmax.f32 %v870, 0.0
        %v904 = vmax.f32 %v873, 0.0
        %v905 = vmax.f32 %v876, 0.0
        %v906 = vmax.f32 %v879, 0.0
        %v907 = vmax.f32 %v882, 0.0
        %v908 = vmax.f32 %v885, 0.0
        %v909 = vmax.f32 %v888, 0.0
        %v910 = vmax.f32 %v891, 0.0
        %v911 = vmax.f32 %v894, 0.0
        %v912 = vld [vmem:[#allocation11] sm:$0xff]
        %v913 = vld [vmem:[#allocation11 + $0x8] sm:$0xff]
        %v914 = vld [vmem:[#allocation11 + $0x10] sm:$0xff]
        %v915 = vld [vmem:[#allocation11 + $0x18] sm:$0xff]
        %v916 = vld [vmem:[#allocation11 + $0x20] sm:$0xff]
        %v917 = vld [vmem:[#allocation11 + $0x28] sm:$0xff]
        %v918 = vld [vmem:[#allocation11 + $0x30] sm:$0xff]
        %v919 = vld [vmem:[#allocation11 + $0x38] sm:$0xff]
        %v920 = vld [vmem:[#allocation11 + $0x40] sm:$0xff]
        %v921 = vld [vmem:[#allocation11 + $0x48] sm:$0xff]
        %v922 = vld [vmem:[#allocation11 + $0x50] sm:$0xff]
        %v923 = vld [vmem:[#allocation11 + $0x58] sm:$0xff]
        %v924 = vld [vmem:[#allocation11 + $0x60] sm:$0xff]
        %v925 = vld [vmem:[#allocation11 + $0x68] sm:$0xff]
        %v926 = vld [vmem:[#allocation11 + $0x70] sm:$0xff]
        %v927 = vld [vmem:[#allocation11 + $0x78] sm:$0xff]
        %v928 = vld [vmem:[%s10] sm:$0x1]
        %v930 = vperm.slane %v928, 0
        %932 = vmatpush.msra.mxu0 %v927
        %933 = vmatpush.msra.mxu0 %v926
        %934 = vmatpush.msra.mxu0 %v925
        %935 = vmatpush.msra.mxu0 %v924
        %936 = vmatpush.msra.mxu0 %v923
        %937 = vmatpush.msra.mxu0 %v922
        %938 = vmatpush.msra.mxu0 %v921
        %939 = vmatpush.msra.mxu0 %v920
        %940 = vmatpush.msra.mxu0 %v919
        %941 = vmatpush.msra.mxu0 %v918
        %942 = vmatpush.msra.mxu0 %v917
        %943 = vmatpush.msra.mxu0 %v916
        %944 = vmatpush.msra.mxu0 %v915
        %945 = vmatpush.msra.mxu0 %v914
        %946 = vmatpush.msra.mxu0 %v913
        %947 = vmatpush.msra.mxu0 %v912
        %948 = vmatmul.f32.gmra.mxu0 %v896
        %v949 = vpop.f32.mrf.mxu0
        %v950 = vadd.f32 %v930, %v949
        %951 = vmatmul.f32.gmra.mxu0 %v897
        %v952 = vpop.f32.mrf.mxu0
        %v953 = vadd.f32 %v930, %v952
        %954 = vmatmul.f32.gmra.mxu0 %v898
        %v955 = vpop.f32.mrf.mxu0
        %v956 = vadd.f32 %v930, %v955
        %957 = vmatmul.f32.gmra.mxu0 %v899
        %v958 = vpop.f32.mrf.mxu0
        %v959 = vadd.f32 %v930, %v958
        %960 = vmatmul.f32.gmra.mxu0 %v900
        %v961 = vpop.f32.mrf.mxu0
        %v962 = vadd.f32 %v930, %v961
        %963 = vmatmul.f32.gmra.mxu0 %v901
        %v964 = vpop.f32.mrf.mxu0
        %v965 = vadd.f32 %v930, %v964
        %966 = vmatmul.f32.gmra.mxu0 %v902
        %v967 = vpop.f32.mrf.mxu0
        %v968 = vadd.f32 %v930, %v967
        %969 = vmatmul.f32.gmra.mxu0 %v903
        %v970 = vpop.f32.mrf.mxu0
        %v971 = vadd.f32 %v930, %v970
        %972 = vmatmul.f32.gmra.mxu0 %v904
        %v973 = vpop.f32.mrf.mxu0
        %v974 = vadd.f32 %v930, %v973
        %975 = vmatmul.f32.gmra.mxu0 %v905
        %v976 = vpop.f32.mrf.mxu0
        %v977 = vadd.f32 %v930, %v976
        %978 = vmatmul.f32.gmra.mxu0 %v906
        %v979 = vpop.f32.mrf.mxu0
        %v980 = vadd.f32 %v930, %v979
        %981 = vmatmul.f32.gmra.mxu0 %v907
        %v982 = vpop.f32.mrf.mxu0
        %v983 = vadd.f32 %v930, %v982
        %984 = vmatmul.f32.gmra.mxu0 %v908
        %v985 = vpop.f32.mrf.mxu0
        %v986 = vadd.f32 %v930, %v985
        %987 = vmatmul.f32.gmra.mxu0 %v909
        %v988 = vpop.f32.mrf.mxu0
        %v989 = vadd.f32 %v930, %v988
        %990 = vmatmul.f32.gmra.mxu0 %v910
        %v991 = vpop.f32.mrf.mxu0
        %v992 = vadd.f32 %v930, %v991
        %993 = vmatmul.f32.gmra.mxu0 %v911
        %v994 = vpop.f32.mrf.mxu0
        %v995 = vadd.f32 %v930, %v994
        %996 = vdwg.mxu0
        %v997 = vlaneseq
        %v998 = vand.u32 %v997, 127
        %vm999 = vcmp.lt.s32.totalorder %v998, 10
        %v1000 = vsel %vm999, %v950, -1e+30
        %v1001 = vsel %vm999, %v953, -1e+30
        %v1002 = vsel %vm999, %v956, -1e+30
        %v1003 = vsel %vm999, %v959, -1e+30
        %v1004 = vsel %vm999, %v962, -1e+30
        %v1005 = vsel %vm999, %v965, -1e+30
        %v1006 = vsel %vm999, %v968, -1e+30
        %v1007 = vsel %vm999, %v971, -1e+30
        %v1008 = vsel %vm999, %v974, -1e+30
        %v1009 = vsel %vm999, %v977, -1e+30
        %v1010 = vsel %vm999, %v980, -1e+30
        %v1011 = vsel %vm999, %v983, -1e+30
        %v1012 = vsel %vm999, %v986, -1e+30
        %v1013 = vsel %vm999, %v989, -1e+30
        %v1014 = vsel %vm999, %v992, -1e+30
        %v1015 = vsel %vm999, %v995, -1e+30
        %1016 = vmax.xlane.f32.xlu0 %v1000
        %v1017 = vpop.xlane.xlu0 %1016
        %1018 = vmax.xlane.f32.xlu0 %v1001
        %v1019 = vpop.xlane.xlu0 %1018
        %1020 = vmax.xlane.f32.xlu0 %v1002
        %v1021 = vpop.xlane.xlu0 %1020
        %1022 = vmax.xlane.f32.xlu0 %v1003
        %v1023 = vpop.xlane.xlu0 %1022
        %1024 = vmax.xlane.f32.xlu0 %v1004
        %v1025 = vpop.xlane.xlu0 %1024
        %1026 = vmax.xlane.f32.xlu0 %v1005
        %v1027 = vpop.xlane.xlu0 %1026
        %1028 = vmax.xlane.f32.xlu0 %v1006
        %v1029 = vpop.xlane.xlu0 %1028
        %1030 = vmax.xlane.f32.xlu0 %v1007
        %v1031 = vpop.xlane.xlu0 %1030
        %1032 = vmax.xlane.f32.xlu0 %v1008
        %v1033 = vpop.xlane.xlu0 %1032
        %1034 = vmax.xlane.f32.xlu0 %v1009
        %v1035 = vpop.xlane.xlu0 %1034
        %1036 = vmax.xlane.f32.xlu0 %v1010
        %v1037 = vpop.xlane.xlu0 %1036
        %1038 = vmax.xlane.f32.xlu0 %v1011
        %v1039 = vpop.xlane.xlu0 %1038
        %1040 = vmax.xlane.f32.xlu0 %v1012
        %v1041 = vpop.xlane.xlu0 %1040
        %1042 = vmax.xlane.f32.xlu0 %v1013
        %v1043 = vpop.xlane.xlu0 %1042
        %1044 = vmax.xlane.f32.xlu0 %v1014
        %v1045 = vpop.xlane.xlu0 %1044
        %1046 = vmax.xlane.f32.xlu0 %v1015
        %v1047 = vpop.xlane.xlu0 %1046
        %v1048 = vsub.f32 %v1000, %v1017
        %v1049 = vsub.f32 %v1001, %v1019
        %v1050 = vsub.f32 %v1002, %v1021
        %v1051 = vsub.f32 %v1003, %v1023
        %v1052 = vsub.f32 %v1004, %v1025
        %v1053 = vsub.f32 %v1005, %v1027
        %v1054 = vsub.f32 %v1006, %v1029
        %v1055 = vsub.f32 %v1007, %v1031
        %v1056 = vsub.f32 %v1008, %v1033
        %v1057 = vsub.f32 %v1009, %v1035
        %v1058 = vsub.f32 %v1010, %v1037
        %v1059 = vsub.f32 %v1011, %v1039
        %v1060 = vsub.f32 %v1012, %v1041
        %v1061 = vsub.f32 %v1013, %v1043
        %v1062 = vsub.f32 %v1014, %v1045
        %v1063 = vsub.f32 %v1015, %v1047
        %v1064 = vmul.f32 %v1048, 1.442695
        %v1065 = vpow.pop %v1064
        %v1066 = vmul.f32 %v1049, 1.442695
        %v1067 = vpow.pop %v1066
        %v1068 = vmul.f32 %v1050, 1.442695
        %v1069 = vpow.pop %v1068
        %v1070 = vmul.f32 %v1051, 1.442695
        %v1071 = vpow.pop %v1070
        %v1072 = vmul.f32 %v1052, 1.442695
        %v1073 = vpow.pop %v1072
        %v1074 = vmul.f32 %v1053, 1.442695
        %v1075 = vpow.pop %v1074
        %v1076 = vmul.f32 %v1054, 1.442695
        %v1077 = vpow.pop %v1076
        %v1078 = vmul.f32 %v1055, 1.442695
        %v1079 = vpow.pop %v1078
        %v1080 = vmul.f32 %v1056, 1.442695
        %v1081 = vpow.pop %v1080
        %v1082 = vmul.f32 %v1057, 1.442695
        %v1083 = vpow.pop %v1082
        %v1084 = vmul.f32 %v1058, 1.442695
        %v1085 = vpow.pop %v1084
        %v1086 = vmul.f32 %v1059, 1.442695
        %v1087 = vpow.pop %v1086
        %v1088 = vmul.f32 %v1060, 1.442695
        %v1089 = vpow.pop %v1088
        %v1090 = vmul.f32 %v1061, 1.442695
        %v1091 = vpow.pop %v1090
        %v1092 = vmul.f32 %v1062, 1.442695
        %v1093 = vpow.pop %v1092
        %v1094 = vmul.f32 %v1063, 1.442695
        %v1095 = vpow.pop %v1094
        %1096 = vadd.xlane.f32.xlu0 %v1065
        %v1097 = vpop.xlane.xlu0 %1096
        %1098 = vadd.xlane.f32.xlu0 %v1067
        %v1099 = vpop.xlane.xlu0 %1098
        %1100 = vadd.xlane.f32.xlu0 %v1069
        %v1101 = vpop.xlane.xlu0 %1100
        %1102 = vadd.xlane.f32.xlu0 %v1071
        %v1103 = vpop.xlane.xlu0 %1102
        %1104 = vadd.xlane.f32.xlu0 %v1073
        %v1105 = vpop.xlane.xlu0 %1104
        %1106 = vadd.xlane.f32.xlu0 %v1075
        %v1107 = vpop.xlane.xlu0 %1106
        %1108 = vadd.xlane.f32.xlu0 %v1077
        %v1109 = vpop.xlane.xlu0 %1108
        %1110 = vadd.xlane.f32.xlu0 %v1079
        %v1111 = vpop.xlane.xlu0 %1110
        %1112 = vadd.xlane.f32.xlu0 %v1081
        %v1113 = vpop.xlane.xlu0 %1112
        %1114 = vadd.xlane.f32.xlu0 %v1083
        %v1115 = vpop.xlane.xlu0 %1114
        %1116 = vadd.xlane.f32.xlu0 %v1085
        %v1117 = vpop.xlane.xlu0 %1116
        %1118 = vadd.xlane.f32.xlu0 %v1087
        %v1119 = vpop.xlane.xlu0 %1118
        %1120 = vadd.xlane.f32.xlu0 %v1089
        %v1121 = vpop.xlane.xlu0 %1120
        %1122 = vadd.xlane.f32.xlu0 %v1091
        %v1123 = vpop.xlane.xlu0 %1122
        %1124 = vadd.xlane.f32.xlu0 %v1093
        %v1125 = vpop.xlane.xlu0 %1124
        %1126 = vadd.xlane.f32.xlu0 %v1095
        %v1127 = vpop.xlane.xlu0 %1126
        %v1128 = vlog2.pop %v1097
        %v1129 = vmul.f32 %v1128, 0.6931472
        %v1130 = vlog2.pop %v1099
        %v1131 = vmul.f32 %v1130, 0.6931472
        %v1132 = vlog2.pop %v1101
        %v1133 = vmul.f32 %v1132, 0.6931472
        %v1134 = vlog2.pop %v1103
        %v1135 = vmul.f32 %v1134, 0.6931472
        %v1136 = vlog2.pop %v1105
        %v1137 = vmul.f32 %v1136, 0.6931472
        %v1138 = vlog2.pop %v1107
        %v1139 = vmul.f32 %v1138, 0.6931472
        %v1140 = vlog2.pop %v1109
        %v1141 = vmul.f32 %v1140, 0.6931472
        %v1142 = vlog2.pop %v1111
        %v1143 = vmul.f32 %v1142, 0.6931472
        %v1144 = vlog2.pop %v1113
        %v1145 = vmul.f32 %v1144, 0.6931472
        %v1146 = vlog2.pop %v1115
        %v1147 = vmul.f32 %v1146, 0.6931472
        %v1148 = vlog2.pop %v1117
        %v1149 = vmul.f32 %v1148, 0.6931472
        %v1150 = vlog2.pop %v1119
        %v1151 = vmul.f32 %v1150, 0.6931472
        %v1152 = vlog2.pop %v1121
        %v1153 = vmul.f32 %v1152, 0.6931472
        %v1154 = vlog2.pop %v1123
        %v1155 = vmul.f32 %v1154, 0.6931472
        %v1156 = vlog2.pop %v1125
        %v1157 = vmul.f32 %v1156, 0.6931472
        %v1158 = vlog2.pop %v1127
        %v1159 = vmul.f32 %v1158, 0.6931472
        %v1160 = vsub.f32 %v1048, %v1129
        %v1161 = vsub.f32 %v1049, %v1131
        %v1162 = vsub.f32 %v1050, %v1133
        %v1163 = vsub.f32 %v1051, %v1135
        %v1164 = vsub.f32 %v1052, %v1137
        %v1165 = vsub.f32 %v1053, %v1139
        %v1166 = vsub.f32 %v1054, %v1141
        %v1167 = vsub.f32 %v1055, %v1143
        %v1168 = vsub.f32 %v1056, %v1145
        %v1169 = vsub.f32 %v1057, %v1147
        %v1170 = vsub.f32 %v1058, %v1149
        %v1171 = vsub.f32 %v1059, %v1151
        %v1172 = vsub.f32 %v1060, %v1153
        %v1173 = vsub.f32 %v1061, %v1155
        %v1174 = vsub.f32 %v1062, %v1157
        %v1175 = vsub.f32 %v1063, %v1159
        %1176 = vst [vmem:[%s489] sm:$0xff] %v1160
        %1177 = vst [vmem:[%s489 + $0x8] sm:$0xff] %v1161
        %1178 = vst [vmem:[%s489 + $0x10] sm:$0xff] %v1162
        %1179 = vst [vmem:[%s489 + $0x18] sm:$0xff] %v1163
        %1180 = vst [vmem:[%s489 + $0x20] sm:$0xff] %v1164
        %1181 = vst [vmem:[%s489 + $0x28] sm:$0xff] %v1165
        %1182 = vst [vmem:[%s489 + $0x30] sm:$0xff] %v1166
        %1183 = vst [vmem:[%s489 + $0x38] sm:$0xff] %v1167
        %1184 = vst [vmem:[%s489 + $0x40] sm:$0xff] %v1168
        %1185 = vst [vmem:[%s489 + $0x48] sm:$0xff] %v1169
        %1186 = vst [vmem:[%s489 + $0x50] sm:$0xff] %v1170
        %1187 = vst [vmem:[%s489 + $0x58] sm:$0xff] %v1171
        %1188 = vst [vmem:[%s489 + $0x60] sm:$0xff] %v1172
        %1189 = vst [vmem:[%s489 + $0x68] sm:$0xff] %v1173
        %1190 = vst [vmem:[%s489 + $0x70] sm:$0xff] %v1174
        %1191 = vst [vmem:[%s489 + $0x78] sm:$0xff] %v1175
        %s1192 = sand.u32 %s275, 1
        %s1193 = scalar_lea.sflag [#allocation4], %s1192
        %s1194 = sand.u32 %s275, 1
        %s1195 = smul.addr %s1194, 128
        %s1196 = scalar_lea.vmem [#allocation13], %s1195
        // Predicated region
        $region89: #{tpu_custom_call.1} parent=63 // pred_check
          %p1197 = pneg %p285
        $region90: #{tpu_custom_call.1} parent=63 // pred_check_branch
          %1199 = sbr.rel (%p1197) target = $region92
        $region91: #{tpu_custom_call.1} parent=63 // pred_region
          %s1200 = smul.u32 16, %s31
          %1202 = vsyncadd %s1193, 0
          %s1203 = smul.addr %s1200, 8
          %s1204 = scalar_lea.hbm %s11, %s1203
          %s1205 = sshll.u32 %s1196, 4
          %s1206 = int_to_ptr.vmem [resolvable:$true] %s1205
          %s1207 = sshll.u32 %s1204, 4
          %s1208 = int_to_ptr.hbm [resolvable:$true] %s1207
          %1213 = dma.vmem_to_hbm [thread:$0]  %s1206, 2048, %s1208, %s1193, 128, 128, 8
        $region92: #{tpu_custom_call.1} parent=63 // pred_fallthru
          _
      $region64: #{tpu_custom_call.1} parent=5 // pred_fallthru
        _
      %p1214 = scmp.le.s32.totalorder 2, %s26
      // Predicated region
      $region93: #{tpu_custom_call.1} parent=5 // pred_check
        %p1215 = pneg %p1214
      $region94: #{tpu_custom_call.1} parent=5 // pred_check_branch
        %1217 = sbr.rel (%p1215) target = $region96
      $region95: #{tpu_custom_call.1} parent=5 // pred_region
        %s1218 = ssub.s32 %s26, 2
        // Predicated region
        $region97: #{tpu_custom_call.1} parent=95 // pred_check
          %p1219 = pneg %p291
        $region98: #{tpu_custom_call.1} parent=95 // pred_check_branch
          %1221 = sbr.rel (%p1219) target = $region100
        $region99: #{tpu_custom_call.1} parent=95 // pred_region
          %s1222 = sand.u32 %s276, 1
          %s1223 = scalar_lea.sflag [#allocation4], %s1222
          %s1224 = sand.u32 %s276, 1
          %s1225 = smul.addr %s1224, 128
          %s1226 = scalar_lea.vmem [#allocation13], %s1225
          %1228 = dma.done %s1223, 2048
        $region100: #{tpu_custom_call.1} parent=95 // pred_fallthru
          _
      $region96: #{tpu_custom_call.1} parent=5 // pred_fallthru
        _
    $region6: #{tpu_custom_call.1} parent=1 // loop_footer
      %s30 = sadd.s32 1, %s26
    $region7: #{tpu_custom_call.1} parent=1 // loop_footer_branch
      %25 = sbr.rel target = $region3
    $region8: #{tpu_custom_call.1} parent=1 // loop_exit
      _
    %1229 = vsyncpa [#allocation3], 1
    %s1230 = scalar_lea.sflag [#allocation3], 1
    %1231 = vsyncpa %s1230, 1
    %1232 = vsyncpa [#allocation6], 1
    %1233 = vsyncpa [#allocation9], 1
    %1234 = vsyncpa [#allocation12], 1
    %1235 = vsyncpa [#allocation4], 1
    %s1236 = scalar_lea.sflag [#allocation4], 1
    %1237 = vsyncpa %s1236, 1

</llo_original>
